<compile_context>
chip_gen: v5e
topology: v5e:2x2
jax: 0.10.0
libtpu: 0.0.40
codegen_flags: <defaults>
</compile_context>

<pallas_src>
import functools
import math

import jax
import jax.numpy as jnp
from jax import lax
from jax.experimental import pallas as pl
from jax.experimental.pallas import tpu as pltpu


def _flash_sdpa_kernel(q_ref, k_ref, v_ref, o_ref, m_sc, l_sc, acc_sc, *, scale):
    """One (batch, M-tile, N-tile) step of flash-style SDPA.

    Block views (batch dim squeezed away by the BlockSpecs):
      q_ref: (Mblk, D)  k_ref: (Nblk, D)  v_ref: (Nblk, E)  o_ref: (Mblk, E)
    Scratch (resident across the N-tile axis, re-initialized at kv == 0):
      m_sc: (Mblk, 1) f32 running max
      l_sc: (Mblk, 1) f32 running sum
      acc_sc: (Mblk, E) f32 unnormalized output accumulator
    """
    kv = pl.program_id(2)

    @pl.when(kv == 0)
    def _():
        m_sc[...] = jnp.full(m_sc.shape, -jnp.inf, dtype=m_sc.dtype)
        l_sc[...] = jnp.zeros(l_sc.shape, dtype=l_sc.dtype)
        acc_sc[...] = jnp.zeros(acc_sc.shape, dtype=acc_sc.dtype)

    # Fold 1/inv_scale_factor into q (M*D work, cheaper than scaling (M,N)
    # scores).  bf16 operands feed the MXU; softmax statistics stay in f32.
    q = (q_ref[...].astype(jnp.float32) * scale).astype(jnp.bfloat16)
    k = k_ref[...].astype(jnp.bfloat16)
    v = v_ref[...].astype(jnp.bfloat16)

    # s = q @ k^T without an explicit transpose: contract the last dims.
    s = lax.dot_general(q, k, (((1,), (1,)), ((), ())),
                        preferred_element_type=jnp.float32)

    # Online (streaming) softmax across N-tiles.
    m_prev = m_sc[...]
    m_new = jnp.maximum(m_prev, jnp.max(s, axis=-1, keepdims=True))
    alpha = jnp.exp(m_prev - m_new)            # rescale factor for old stats
    p = jnp.exp(s - m_new)
    l_sc[...] = alpha * l_sc[...] + jnp.sum(p, axis=-1, keepdims=True)
    acc_sc[...] = alpha * acc_sc[...] + lax.dot_general(
        p.astype(jnp.bfloat16), v, (((1,), (0,)), ((), ())),
        preferred_element_type=jnp.float32)
    m_sc[...] = m_new

    @pl.when(kv == pl.num_programs(2) - 1)
    def _():
        # Normalize the (Mblk, E) accumulator once; reciprocal on the EUP slot.
        inv_l = pl.reciprocal(l_sc[...], approx=True)
        o_ref[...] = (acc_sc[...] * inv_l).astype(o_ref.dtype)


def sdpa_pallas(x1, x2, x3, inv_scale_factor, *, m_block=None, n_block=None):
    """softmax((x1 @ x2^T) / inv_scale_factor, axis=-1) @ x3 for 3-D inputs."""
    B, M, D = x1.shape
    Bk, N, Dk = x2.shape
    Bv, Nv, E = x3.shape
    assert B == Bk == Bv and D == Dk and N == Nv

    # >=256 M/N tiles fill the 256x256 MXU on v6e/v7x; fall back to the full
    # extent for small problems.  batch_block=1 plus an M-tile "parallel" axis
    # guarantees enough parallel grid steps for both v7x TensorCores even when
    # B is tiny, and keeps the per-step VMEM footprint small on every gen.
    if m_block is None:
        m_block = min(M, 256)
    if n_block is None:
        n_block = min(N, 256)
    # TODO(synk): mask partial tiles instead of requiring exact divisibility.
    assert M % m_block == 0 and N % n_block == 0

    grid = (B, M // m_block, N // n_block)
    kernel = functools.partial(_flash_sdpa_kernel,
                               scale=1.0 / float(inv_scale_factor))

    itemsize = jnp.dtype(x1.dtype).itemsize
    cost = pl.CostEstimate(
        flops=2 * B * M * N * D + 2 * B * M * N * E,
        transcendentals=B * M * N,
        bytes_accessed=(x1.size + x2.size + x3.size + B * M * E) * itemsize,
    )

    return pl.pallas_call(
        kernel,
        out_shape=jax.ShapeDtypeStruct((B, M, E), x1.dtype),
        grid_spec=pltpu.PrefetchScalarGridSpec(
            num_scalar_prefetch=0,
            grid=grid,
            in_specs=[
                pl.BlockSpec((pl.Squeezed(), m_block, D), lambda b, i, j: (b, i, 0)),
                pl.BlockSpec((pl.Squeezed(), n_block, D), lambda b, i, j: (b, j, 0)),
                pl.BlockSpec((pl.Squeezed(), n_block, E), lambda b, i, j: (b, j, 0)),
            ],
            out_specs=pl.BlockSpec((pl.Squeezed(), m_block, E),
                                   lambda b, i, j: (b, i, 0)),
            scratch_shapes=[
                pltpu.VMEM((m_block, 1), jnp.float32),   # running max m
                pltpu.VMEM((m_block, 1), jnp.float32),   # running sum l
                pltpu.VMEM((m_block, E), jnp.float32),   # unnormalized acc
            ],
        ),
        compiler_params=pltpu.CompilerParams(
            dimension_semantics=("parallel", "parallel", "arbitrary"),
        ),
        cost_estimate=cost,
    )(x1, x2, x3)


def sdpa_ref(x1, x2, x3, inv_scale_factor):
    qk = jnp.einsum("bmd,bnd->bmn", x1, x2)
    scaled = qk / inv_scale_factor
    p = jax.nn.softmax(scaled, axis=-1)
    return jnp.einsum("bmn,bne->bme", p, x3)


if __name__ == "__main__":
    # The original script's globals (6,25,12)/(6,12,64)/(6,64,25) are shape-
    # inconsistent with its own forward (it lives in jit_fail/).  We pick
    # shapes consistent with the SDPA semantics, lane-dense (last dims are
    # multiples of 128), and large enough to exercise >1 N-tile (online
    # softmax) and multiple parallel grid steps.
    B, M, N, D, E = 4, 256, 512, 128, 128
    key = jax.random.PRNGKey(0)
    k1, k2, k3 = jax.random.split(key, 3)
    # bf16 straight from the producer: halves the DMA bytes of the mem-bound
    # kernel; no wrapper-side astype / extra HBM round-trip.
    x1 = jax.random.normal(k1, (B, M, D), dtype=jnp.bfloat16)  # query
    x2 = jax.random.normal(k2, (B, N, D), dtype=jnp.bfloat16)  # key
    x3 = jax.random.normal(k3, (B, N, E), dtype=jnp.bfloat16)  # value

    # `inv_scale_factor` is an undefined global in the original module;
    # define it deterministically as sqrt(head_dim) (standard SDPA scaling).
    inv_scale_factor = math.sqrt(D)

    out = sdpa_pallas(x1, x2, x3, inv_scale_factor)
    jax.block_until_ready(out)

    ref = sdpa_ref(x1.astype(jnp.float32), x2.astype(jnp.float32),
                   x3.astype(jnp.float32), inv_scale_factor)
    assert out.shape == (B, M, E)
    # bf16 I/O + bf16 P matmul + approx reciprocal vs an all-f32 reference:
    # loosened (but still tight for bf16) tolerance.
    assert jnp.allclose(out.astype(jnp.float32), ref, atol=3e-2, rtol=3e-2)

    print("KERNEL_OK")
</pallas_src>

<mosaic_0001>
module attributes {stable_mosaic.version = 11 : i64} {
  func.func @_flash_sdpa_kernel(%arg0: i32, %arg1: i32, %arg2: i32, %arg3: memref<1x256x128xbf16, #tpu.memory_space<vmem>>, %arg4: memref<1x256x128xbf16, #tpu.memory_space<vmem>>, %arg5: memref<1x256x128xbf16, #tpu.memory_space<vmem>>, %arg6: memref<1x256x128xbf16, #tpu.memory_space<vmem>>, %arg7: memref<256x1xf32, #tpu.memory_space<vmem>>, %arg8: memref<256x1xf32, #tpu.memory_space<vmem>>, %arg9: memref<256x128xf32, #tpu.memory_space<vmem>>) attributes {dimension_semantics = [#tpu.dimension_semantics<parallel>, #tpu.dimension_semantics<parallel>, #tpu.dimension_semantics<arbitrary>], iteration_bounds = array<i64: 4, 1, 2>, scalar_prefetch = 0 : i64, scratch_operands = 3 : i64, tpu.core_type = #tpu.core_type<tc>, window_params = [{transform_indices = @transform_0, window_bounds = array<i64: 1, 256, 128>}, {transform_indices = @transform_1, window_bounds = array<i64: 1, 256, 128>}, {transform_indices = @transform_2, window_bounds = array<i64: 1, 256, 128>}, {transform_indices = @transform_3, window_bounds = array<i64: 1, 256, 128>}]} {
    %c0_i32 = arith.constant 0 : i32
    %0 = arith.cmpi eq, %arg2, %c0_i32 : i32
    %1 = arith.extui %0 : i1 to i32
    %c0_i32_0 = arith.constant 0 : i32
    %2 = arith.cmpi ne, %1, %c0_i32_0 : i32
    scf.if %2 {
      %cst_26 = arith.constant 0xFF800000 : f32
      %40 = vector.broadcast %cst_26 : f32 to vector<256x1xf32>
      %c0_27 = arith.constant 0 : index
      %c0_28 = arith.constant 0 : index
      %41 = vector.load %arg7[%c0_27, %c0_28] : memref<256x1xf32, #tpu.memory_space<vmem>>, vector<256x1xf32>
      tpu.vector_store %arg7[%c0_27, %c0_28], %40 {strides = array<i32>} : memref<256x1xf32, #tpu.memory_space<vmem>>, vector<256x1xf32>,
      %cst_29 = arith.constant 0.000000e+00 : f32
      %42 = vector.broadcast %cst_29 : f32 to vector<256x1xf32>
      %c0_30 = arith.constant 0 : index
      %c0_31 = arith.constant 0 : index
      %43 = vector.load %arg8[%c0_30, %c0_31] : memref<256x1xf32, #tpu.memory_space<vmem>>, vector<256x1xf32>
      tpu.vector_store %arg8[%c0_30, %c0_31], %42 {strides = array<i32>} : memref<256x1xf32, #tpu.memory_space<vmem>>, vector<256x1xf32>,
      %cst_32 = arith.constant 0.000000e+00 : f32
      %44 = vector.broadcast %cst_32 : f32 to vector<256x128xf32>
      %c0_33 = arith.constant 0 : index
      %c0_34 = arith.constant 0 : index
      %45 = vector.load %arg9[%c0_33, %c0_34] : memref<256x128xf32, #tpu.memory_space<vmem>>, vector<256x128xf32>
      tpu.vector_store %arg9[%c0_33, %c0_34], %44 {strides = array<i32>} : memref<256x128xf32, #tpu.memory_space<vmem>>, vector<256x128xf32>,
    } else {
    }
    %c0 = arith.constant 0 : index
    %c0_1 = arith.constant 0 : index
    %c0_2 = arith.constant 0 : index
    %3 = vector.load %arg3[%c0, %c0_1, %c0_2] : memref<1x256x128xbf16, #tpu.memory_space<vmem>>, vector<1x256x128xbf16>
    %4 = vector.shape_cast %3 : vector<1x256x128xbf16> to vector<256x128xbf16>
    %5 = arith.extf %4 : vector<256x128xbf16> to vector<256x128xf32>
    %cst = arith.constant 0.0883883461 : f32
    %6 = vector.broadcast %cst : f32 to vector<256x128xf32>
    %7 = arith.mulf %5, %6 : vector<256x128xf32>
    %8 = arith.truncf %7 : vector<256x128xf32> to vector<256x128xbf16>
    %c0_3 = arith.constant 0 : index
    %c0_4 = arith.constant 0 : index
    %c0_5 = arith.constant 0 : index
    %9 = vector.load %arg4[%c0_3, %c0_4, %c0_5] : memref<1x256x128xbf16, #tpu.memory_space<vmem>>, vector<1x256x128xbf16>
    %10 = vector.shape_cast %9 : vector<1x256x128xbf16> to vector<256x128xbf16>
    %c0_6 = arith.constant 0 : index
    %c0_7 = arith.constant 0 : index
    %c0_8 = arith.constant 0 : index
    %11 = vector.load %arg5[%c0_6, %c0_7, %c0_8] : memref<1x256x128xbf16, #tpu.memory_space<vmem>>, vector<1x256x128xbf16>
    %12 = vector.shape_cast %11 : vector<1x256x128xbf16> to vector<256x128xbf16>
    %cst_9 = arith.constant dense<0.000000e+00> : vector<256x256xf32>
    %13 = tpu.matmul %8, %10, %cst_9 {dimension_numbers = #tpu.dot_dimension_numbers<[1], [1], [0], [0], [0, 0, 1, 0], [], []>} : vector<256x128xbf16>, vector<256x128xbf16>, vector<256x256xf32> -> vector<256x256xf32>
    %c0_10 = arith.constant 0 : index
    %c0_11 = arith.constant 0 : index
    %14 = vector.load %arg7[%c0_10, %c0_11] : memref<256x1xf32, #tpu.memory_space<vmem>>, vector<256x1xf32>
    %cst_12 = arith.constant dense<0xFF800000> : vector<256xf32>
    %15 = vector.multi_reduction <maximumf>, %13, %cst_12 [1] : vector<256x256xf32> to vector<256xf32>
    %16 = vector.shape_cast %15 : vector<256xf32> to vector<256x1xf32>
    %17 = arith.maximumf %14, %16 : vector<256x1xf32>
    %18 = arith.subf %14, %17 : vector<256x1xf32>
    %19 = math.exp %18 : vector<256x1xf32>
    %20 = vector.broadcast %17 : vector<256x1xf32> to vector<256x256xf32>
    %21 = arith.subf %13, %20 : vector<256x256xf32>
    %22 = math.exp %21 : vector<256x256xf32>
    %c0_13 = arith.constant 0 : index
    %c0_14 = arith.constant 0 : index
    %23 = vector.load %arg8[%c0_13, %c0_14] : memref<256x1xf32, #tpu.memory_space<vmem>>, vector<256x1xf32>
    %24 = arith.mulf %19, %23 : vector<256x1xf32>
    %cst_15 = arith.constant dense<0.000000e+00> : vector<256xf32>
    %25 = vector.multi_reduction <add>, %22, %cst_15 [1] : vector<256x256xf32> to vector<256xf32>
    %26 = vector.shape_cast %25 : vector<256xf32> to vector<256x1xf32>
    %27 = arith.addf %24, %26 : vector<256x1xf32>
    %c0_16 = arith.constant 0 : index
    %c0_17 = arith.constant 0 : index
    %28 = vector.load %arg8[%c0_16, %c0_17] : memref<256x1xf32, #tpu.memory_space<vmem>>, vector<256x1xf32>
    tpu.vector_store %arg8[%c0_16, %c0_17], %27 {strides = array<i32>} : memref<256x1xf32, #tpu.memory_space<vmem>>, vector<256x1xf32>,
    %c0_18 = arith.constant 0 : index
    %c0_19 = arith.constant 0 : index
    %29 = vector.load %arg9[%c0_18, %c0_19] : memref<256x128xf32, #tpu.memory_space<vmem>>, vector<256x128xf32>
    %30 = vector.broadcast %19 : vector<256x1xf32> to vector<256x128xf32>
    %31 = arith.mulf %30, %29 : vector<256x128xf32>
    %32 = arith.truncf %22 : vector<256x256xf32> to vector<256x256xbf16>
    %cst_20 = arith.constant dense<0.000000e+00> : vector<256x128xf32>
    %33 = tpu.matmul %32, %12, %cst_20 {dimension_numbers = #tpu.dot_dimension_numbers<[1], [0], [0], [1], [0, 0, 1, 1], [], []>} : vector<256x256xbf16>, vector<256x128xbf16>, vector<256x128xf32> -> vector<256x128xf32>
    %34 = arith.addf %31, %33 : vector<256x128xf32>
    %c0_21 = arith.constant 0 : index
    %c0_22 = arith.constant 0 : index
    %35 = vector.load %arg9[%c0_21, %c0_22] : memref<256x128xf32, #tpu.memory_space<vmem>>, vector<256x128xf32>
    tpu.vector_store %arg9[%c0_21, %c0_22], %34 {strides = array<i32>} : memref<256x128xf32, #tpu.memory_space<vmem>>, vector<256x128xf32>,
    %c0_23 = arith.constant 0 : index
    %c0_24 = arith.constant 0 : index
    %36 = vector.load %arg7[%c0_23, %c0_24] : memref<256x1xf32, #tpu.memory_space<vmem>>, vector<256x1xf32>
    tpu.vector_store %arg7[%c0_23, %c0_24], %17 {strides = array<i32>} : memref<256x1xf32, #tpu.memory_space<vmem>>, vector<256x1xf32>,
    %c1_i32 = arith.constant 1 : i32
    %37 = arith.cmpi eq, %arg2, %c1_i32 : i32
    %38 = arith.extui %37 : i1 to i32
    %c0_i32_25 = arith.constant 0 : i32
    %39 = arith.cmpi ne, %38, %c0_i32_25 : i32
    scf.if %39 {
      %c0_26 = arith.constant 0 : index
      %c0_27 = arith.constant 0 : index
      %40 = vector.load %arg8[%c0_26, %c0_27] : memref<256x1xf32, #tpu.memory_space<vmem>>, vector<256x1xf32>
      %41 = tpu.reciprocal %40 {approx = true} : vector<256x1xf32> -> vector<256x1xf32>
      %c0_28 = arith.constant 0 : index
      %c0_29 = arith.constant 0 : index
      %42 = vector.load %arg9[%c0_28, %c0_29] : memref<256x128xf32, #tpu.memory_space<vmem>>, vector<256x128xf32>
      %43 = vector.broadcast %41 : vector<256x1xf32> to vector<256x128xf32>
      %44 = arith.mulf %42, %43 : vector<256x128xf32>
      %45 = arith.truncf %44 : vector<256x128xf32> to vector<256x128xbf16>
      %c0_30 = arith.constant 0 : index
      %c0_31 = arith.constant 0 : index
      %c0_32 = arith.constant 0 : index
      %46 = vector.load %arg6[%c0_30, %c0_31, %c0_32] : memref<1x256x128xbf16, #tpu.memory_space<vmem>>, vector<1x256x128xbf16>
      %47 = vector.shape_cast %46 : vector<1x256x128xbf16> to vector<256x128xbf16>
      %48 = vector.shape_cast %45 : vector<256x128xbf16> to vector<1x256x128xbf16>
      tpu.vector_store %arg6[%c0_30, %c0_31, %c0_32], %48 {strides = array<i32>} : memref<1x256x128xbf16, #tpu.memory_space<vmem>>, vector<1x256x128xbf16>,
    } else {
    }
    return
  }
  func.func @transform_0(%arg0: i32, %arg1: i32, %arg2: i32) -> (i32, i32, i32) {
    %c0_i32 = arith.constant 0 : i32
    %c0_i32_0 = arith.constant 0 : i32
    return %arg0, %arg1, %c0_i32 : i32, i32, i32
  }
  func.func @transform_1(%arg0: i32, %arg1: i32, %arg2: i32) -> (i32, i32, i32) {
    %c0_i32 = arith.constant 0 : i32
    %c0_i32_0 = arith.constant 0 : i32
    return %arg0, %arg2, %c0_i32 : i32, i32, i32
  }
  func.func @transform_2(%arg0: i32, %arg1: i32, %arg2: i32) -> (i32, i32, i32) {
    %c0_i32 = arith.constant 0 : i32
    %c0_i32_0 = arith.constant 0 : i32
    return %arg0, %arg2, %c0_i32 : i32, i32, i32
  }
  func.func @transform_3(%arg0: i32, %arg1: i32, %arg2: i32) -> (i32, i32, i32) {
    %c0_i32 = arith.constant 0 : i32
    %c0_i32_0 = arith.constant 0 : i32
    return %arg0, %arg1, %c0_i32 : i32, i32, i32
  }
}

</mosaic_0001>

<llo_original>
// kernel: tpu_custom_call.1
$region0: #{tpu_custom_call.1}
  #allocation0 [shape = 'u32[]', space=smem, size = 0x4, offset = 0x4, fixed_abs, tag = 'smem constant byte address 0x4 - core index']
  #allocation1 [shape = 'u32[72,128]{1,0:T(1,128)}', space=vmem, size = 0x9000, scoped, tag = 'internal scratch']
  #allocation2 [shape = 'f32[256,1]{1,0:T(8,128)}', space=vmem, size = 0x20000, scoped, tag = 'scratch operand']
  #allocation3 [shape = 'f32[256,1]{1,0:T(8,128)}', space=vmem, size = 0x20000, scoped, tag = 'scratch operand']
  #allocation4 [shape = 'f32[256,128]{1,0:T(8,128)}', space=vmem, size = 0x20000, scoped, tag = 'scratch operand']
  %s0 = inlined_call_operand.hbm [shape: bf16[4,256,128], index: 0, kind: input, shape index: {}]
  %s1 = inlined_call_operand.hbm [shape: bf16[4,512,128], index: 1, kind: input, shape index: {}]
  %s2 = inlined_call_operand.hbm [shape: bf16[4,512,128], index: 2, kind: input, shape index: {}]
  %s3 = inlined_call_operand.hbm [shape: bf16[4,256,128], index: 3, kind: output, shape index: {}]
  %s4 = sld [smem:[#allocation0]]
  $region65: #{tpu_custom_call.1} parent=0
    _
  %s6 = ssub.s32 1, %s4
  %s7 = scalar_select 0, %s6, %s4
  $region1: #{tpu_custom_call.1} parent=0
    #allocation5 [shape = 'u8[131072]{0}', space=vmem, size = 0x20000, scoped, tag = 'input window, operand 0']
    #allocation6 [shape = 's32[2]{0}', space=sflag, size = 0x8, scoped, tag = 'scoped memory for tpu_custom_call.1']
    #allocation7 [shape = 's32[2]{0}', space=sflag, size = 0x8, scoped, tag = 'scoped memory for tpu_custom_call.1']
    #allocation8 [shape = 'u8[131072]{0}', space=vmem, size = 0x20000, scoped, tag = 'input window, operand 1']
    #allocation9 [shape = 's32[2]{0}', space=sflag, size = 0x8, scoped, tag = 'scoped memory for tpu_custom_call.1']
    #allocation10 [shape = 'u8[131072]{0}', space=vmem, size = 0x20000, scoped, tag = 'input window, operand 2']
    #allocation11 [shape = 'u8[131072]{0}', space=vmem, size = 0x20000, scoped, tag = 'output window, operand 0']
    %8 = vsyncpa [#allocation6], 0
    %s9 = scalar_lea.sflag [#allocation6], 1
    %10 = vsyncpa %s9, 0
    %11 = vsyncpa [#allocation9], 0
    %s12 = scalar_lea.sflag [#allocation9], 1
    %13 = vsyncpa %s12, 0
    %14 = vsyncpa [#allocation7], 0
    %s15 = scalar_lea.sflag [#allocation7], 1
    %16 = vsyncpa %s15, 0
    loop: start=0, step=1, limit=10
    $region2: #{tpu_custom_call.1} parent=1 // loop_pre_header
      _
    $region3: #{tpu_custom_call.1} parent=1 // loop_header
      %s18 = sphi 0, %s22
      %p19 = scmp.ge.s32.totalorder %s18, 10
      %s25 = sphi 0, %s44
      %s26 = sphi 0, %s40
      %s27 = sphi 0, %s36
      %s28 = sphi 0, %s25
      %s29 = sphi 0, %s26
      %s30 = sphi 0, %s27
      %s31 = sphi 0, %s28
      %s32 = sphi 0, %s29
      %s33 = sphi 0, %s30
      %s49 = sphi 0, %s51
      %s52 = sphi 0, %s49
      %s53 = sphi 0, %s52
      %s69 = sphi 0, %s53
      %s77 = sphi 0, %s79
      %s80 = sphi 0, %s77
      %s81 = sphi 0, %s80
      %s97 = sphi 0, %s81
      %s105 = sphi 0, %s107
      %s108 = sphi 0, %s105
      %s109 = sphi 0, %s108
      %s125 = sphi 0, %s109
      %s133 = sphi 0, %s135
      %s136 = sphi 0, %s133
      %s137 = sphi 0, %s136
      %s153 = sphi 0, %s137
    $region4: #{tpu_custom_call.1} parent=1 // loop_header_branch
      %21 = sbr.rel (%p19) target = $region8
    $region5: #{tpu_custom_call.1} parent=1 // loop_body
      %s23 = ssub.s32 %s18, 1
      %s24 = ssub.s32 %s18, 2
      %s34 = sadd.s32 1, %s27
      %p35 = scmp.ge.s32.totalorder %s34, 2
      %s36 = scalar_select %p35, 0, %s34
      %s37 = sadd.s32 1, %s26
      %s38 = scalar_select %p35, %s37, %s26
      %p39 = scmp.ge.s32.totalorder %s38, 1
      %s40 = scalar_select %p39, 0, %s38
      %s41 = sadd.s32 1, %s25
      %s42 = scalar_select %p39, %s41, %s25
      %p43 = scmp.ge.s32.totalorder %s42, 4
      %s44 = scalar_select %p43, 0, %s42
      %s45 = ssub.s32 %s25, %s44
      %s46 = ssub.s32 %s26, %s40
      %s47 = sor.u32 %s45, %s46
      %p48 = scmp.eq.s32.totalorder %s47, 0
      %s50 = sadd.s32 %s49, 1
      %s51 = scalar_select %p48, %s49, %s50
      %p54 = pneg %p48
      %p55 = scmp.eq.s32.totalorder %s18, 7
      %p56 = por %p54, %p55
      %p57 = scmp.ne.s32.totalorder %s49, %s52
      %p58 = scmp.eq.s32.totalorder %s18, 0
      %p59 = por %p57, %p58
      %p60 = scmp.ne.s32.totalorder %s49, %s52
      %p61 = scmp.eq.s32.totalorder %s23, 7
      %p62 = por %p60, %p61
      %p63 = scmp.ne.s32.totalorder %s52, %s53
      %p64 = scmp.eq.s32.totalorder %s23, 0
      %p65 = por %p63, %p64
      %p66 = scmp.ne.s32.totalorder %s52, %s53
      %p67 = scmp.eq.s32.totalorder %s24, 7
      %p68 = por %p66, %p67
      %p70 = scmp.ne.s32.totalorder %s53, %s69
      %p71 = scmp.eq.s32.totalorder %s24, 0
      %p72 = por %p70, %p71
      %s73 = ssub.s32 %s25, %s44
      %s74 = ssub.s32 %s27, %s36
      %s75 = sor.u32 %s73, %s74
      %p76 = scmp.eq.s32.totalorder %s75, 0
      %s78 = sadd.s32 %s77, 1
      %s79 = scalar_select %p76, %s77, %s78
      %p82 = pneg %p76
      %p83 = scmp.eq.s32.totalorder %s18, 7
      %p84 = por %p82, %p83
      %p85 = scmp.ne.s32.totalorder %s77, %s80
      %p86 = scmp.eq.s32.totalorder %s18, 0
      %p87 = por %p85, %p86
      %p88 = scmp.ne.s32.totalorder %s77, %s80
      %p89 = scmp.eq.s32.totalorder %s23, 7
      %p90 = por %p88, %p89
      %p91 = scmp.ne.s32.totalorder %s80, %s81
      %p92 = scmp.eq.s32.totalorder %s23, 0
      %p93 = por %p91, %p92
      %p94 = scmp.ne.s32.totalorder %s80, %s81
      %p95 = scmp.eq.s32.totalorder %s24, 7
      %p96 = por %p94, %p95
      %p98 = scmp.ne.s32.totalorder %s81, %s97
      %p99 = scmp.eq.s32.totalorder %s24, 0
      %p100 = por %p98, %p99
      %s101 = ssub.s32 %s25, %s44
      %s102 = ssub.s32 %s27, %s36
      %s103 = sor.u32 %s101, %s102
      %p104 = scmp.eq.s32.totalorder %s103, 0
      %s106 = sadd.s32 %s105, 1
      %s107 = scalar_select %p104, %s105, %s106
      %p110 = pneg %p104
      %p111 = scmp.eq.s32.totalorder %s18, 7
      %p112 = por %p110, %p111
      %p113 = scmp.ne.s32.totalorder %s105, %s108
      %p114 = scmp.eq.s32.totalorder %s18, 0
      %p115 = por %p113, %p114
      %p116 = scmp.ne.s32.totalorder %s105, %s108
      %p117 = scmp.eq.s32.totalorder %s23, 7
      %p118 = por %p116, %p117
      %p119 = scmp.ne.s32.totalorder %s108, %s109
      %p120 = scmp.eq.s32.totalorder %s23, 0
      %p121 = por %p119, %p120
      %p122 = scmp.ne.s32.totalorder %s108, %s109
      %p123 = scmp.eq.s32.totalorder %s24, 7
      %p124 = por %p122, %p123
      %p126 = scmp.ne.s32.totalorder %s109, %s125
      %p127 = scmp.eq.s32.totalorder %s24, 0
      %p128 = por %p126, %p127
      %s129 = ssub.s32 %s25, %s44
      %s130 = ssub.s32 %s26, %s40
      %s131 = sor.u32 %s129, %s130
      %p132 = scmp.eq.s32.totalorder %s131, 0
      %s134 = sadd.s32 %s133, 1
      %s135 = scalar_select %p132, %s133, %s134
      %p138 = pneg %p132
      %p139 = scmp.eq.s32.totalorder %s18, 7
      %p140 = por %p138, %p139
      %p141 = scmp.ne.s32.totalorder %s133, %s136
      %p142 = scmp.eq.s32.totalorder %s18, 0
      %p143 = por %p141, %p142
      %p144 = scmp.ne.s32.totalorder %s133, %s136
      %p145 = scmp.eq.s32.totalorder %s23, 7
      %p146 = por %p144, %p145
      %p147 = scmp.ne.s32.totalorder %s136, %s137
      %p148 = scmp.eq.s32.totalorder %s23, 0
      %p149 = por %p147, %p148
      %p150 = scmp.ne.s32.totalorder %s136, %s137
      %p151 = scmp.eq.s32.totalorder %s24, 7
      %p152 = por %p150, %p151
      %p154 = scmp.ne.s32.totalorder %s137, %s153
      %p155 = scmp.eq.s32.totalorder %s24, 0
      %p156 = por %p154, %p155
      %p157 = scmp.le.s32.totalorder 1, %s18
      %p158 = scmp.lt.s32.totalorder %s18, 9
      %p159 = pnand %p157, %p158
      %p160 = pneg %p159
      // Predicated region
      $region9: #{tpu_custom_call.1} parent=5 // pred_check
        _
      $region10: #{tpu_custom_call.1} parent=5 // pred_check_branch
        %162 = sbr.rel (%p159) target = $region12
      $region11: #{tpu_custom_call.1} parent=5 // pred_region
        %s163 = ssub.s32 %s18, 1
      $region12: #{tpu_custom_call.1} parent=5 // pred_fallthru
        _
      %p164 = scmp.lt.s32.totalorder %s18, 8
      // Predicated region
      $region13: #{tpu_custom_call.1} parent=5 // pred_check
        %p165 = pneg %p164
      $region14: #{tpu_custom_call.1} parent=5 // pred_check_branch
        %167 = sbr.rel (%p165) target = $region16
      $region15: #{tpu_custom_call.1} parent=5 // pred_region
        // Predicated region
        $region17: #{tpu_custom_call.1} parent=15 // pred_check
          %p168 = pneg %p59
        $region18: #{tpu_custom_call.1} parent=15 // pred_check_branch
          %170 = sbr.rel (%p168) target = $region20
        $region19: #{tpu_custom_call.1} parent=15 // pred_region
          %s171 = sand.u32 %s49, 1
          %s172 = scalar_lea.sflag [#allocation6], %s171
          %s173 = sand.u32 %s49, 1
          %s174 = smul.addr %s173, 128
          %s175 = scalar_lea.vmem [#allocation5], %s174
          %s176 = smul.u32 32, %s26
          %178 = vsyncadd %s172, 0
          %s179 = smul.addr %s25, 32
          %s180 = sadd.s32 %s176, %s179
          %s181 = smul.addr %s180, 4
          %s182 = scalar_lea.hbm %s0, %s181
          %s183 = sshll.u32 %s182, 4
          %s184 = int_to_ptr.hbm [resolvable:$true] %s183
          %s185 = sshll.u32 %s175, 4
          %s186 = int_to_ptr.vmem [resolvable:$true] %s185
          %191 = dma.hbm_to_vmem [thread:$0]  %s184, 2048, %s186, %s172, 64, 64, 4
        $region20: #{tpu_custom_call.1} parent=15 // pred_fallthru
          _
        // Predicated region
        $region21: #{tpu_custom_call.1} parent=15 // pred_check
          %p192 = pneg %p87
        $region22: #{tpu_custom_call.1} parent=15 // pred_check_branch
          %194 = sbr.rel (%p192) target = $region24
        $region23: #{tpu_custom_call.1} parent=15 // pred_region
          %s195 = sand.u32 %s18, 1
          %s196 = scalar_lea.sflag [#allocation9], %s195
          %s197 = sand.u32 %s77, 1
          %s198 = smul.addr %s197, 128
          %s199 = scalar_lea.vmem [#allocation8], %s198
          %s200 = smul.u32 32, %s27
          %202 = vsyncadd %s196, 0
          %s203 = smul.addr %s25, 64
          %s204 = sadd.s32 %s200, %s203
          %s205 = smul.addr %s204, 4
          %s206 = scalar_lea.hbm %s1, %s205
          %s207 = sshll.u32 %s206, 4
          %s208 = int_to_ptr.hbm [resolvable:$true] %s207
          %s209 = sshll.u32 %s199, 4
          %s210 = int_to_ptr.vmem [resolvable:$true] %s209
          %215 = dma.hbm_to_vmem [thread:$0]  %s208, 2048, %s210, %s196, 64, 64, 4
        $region24: #{tpu_custom_call.1} parent=15 // pred_fallthru
          _
        // Predicated region
        $region25: #{tpu_custom_call.1} parent=15 // pred_check
          %p216 = pneg %p115
        $region26: #{tpu_custom_call.1} parent=15 // pred_check_branch
          %218 = sbr.rel (%p216) target = $region28
        $region27: #{tpu_custom_call.1} parent=15 // pred_region
          %s219 = sand.u32 %s18, 1
          %s220 = scalar_lea.sflag [#allocation9], %s219
          %s221 = sand.u32 %s105, 1
          %s222 = smul.addr %s221, 128
          %s223 = scalar_lea.vmem [#allocation10], %s222
          %s224 = smul.u32 32, %s27
          %226 = vsyncadd %s220, 0
          %s227 = smul.addr %s25, 64
          %s228 = sadd.s32 %s224, %s227
          %s229 = smul.addr %s228, 4
          %s230 = scalar_lea.hbm %s2, %s229
          %s231 = sshll.u32 %s230, 4
          %s232 = int_to_ptr.hbm [resolvable:$true] %s231
          %s233 = sshll.u32 %s223, 4
          %s234 = int_to_ptr.vmem [resolvable:$true] %s233
          %239 = dma.hbm_to_vmem [thread:$0]  %s232, 2048, %s234, %s220, 64, 64, 4
        $region28: #{tpu_custom_call.1} parent=15 // pred_fallthru
          _
      $region16: #{tpu_custom_call.1} parent=5 // pred_fallthru
        _
      %p240 = scmp.le.s32.totalorder 1, %s18
      %p241 = scmp.lt.s32.totalorder %s18, 9
      %p242 = pnand %p240, %p241
      %p243 = pneg %p242
      // Predicated region
      $region29: #{tpu_custom_call.1} parent=5 // pred_check
        _
      $region30: #{tpu_custom_call.1} parent=5 // pred_check_branch
        %245 = sbr.rel (%p242) target = $region32
      $region31: #{tpu_custom_call.1} parent=5 // pred_region
        %s246 = ssub.s32 %s18, 1
        %s247 = sand.u32 %s52, 1
        %s248 = scalar_lea.sflag [#allocation6], %s247
        %s249 = sand.u32 %s52, 1
        %s250 = smul.addr %s249, 128
        %s251 = scalar_lea.vmem [#allocation5], %s250
        // Predicated region
        $region33: #{tpu_custom_call.1} parent=31 // pred_check
          %p252 = pneg %p65
        $region34: #{tpu_custom_call.1} parent=31 // pred_check_branch
          %254 = sbr.rel (%p252) target = $region36
        $region35: #{tpu_custom_call.1} parent=31 // pred_region
          %256 = dma.done %s248, 2048
        $region36: #{tpu_custom_call.1} parent=31 // pred_fallthru
          _
        %s257 = sand.u32 %s23, 1
        %s258 = scalar_lea.sflag [#allocation9], %s257
        %s259 = sand.u32 %s80, 1
        %s260 = smul.addr %s259, 128
        %s261 = scalar_lea.vmem [#allocation8], %s260
        // Predicated region
        $region37: #{tpu_custom_call.1} parent=31 // pred_check
          %p262 = pneg %p93
        $region38: #{tpu_custom_call.1} parent=31 // pred_check_branch
          %264 = sbr.rel (%p262) target = $region40
        $region39: #{tpu_custom_call.1} parent=31 // pred_region
          %266 = dma.done %s258, 2048
        $region40: #{tpu_custom_call.1} parent=31 // pred_fallthru
          _
        %s267 = sand.u32 %s23, 1
        %s268 = scalar_lea.sflag [#allocation9], %s267
        %s269 = sand.u32 %s108, 1
        %s270 = smul.addr %s269, 128
        %s271 = scalar_lea.vmem [#allocation10], %s270
        // Predicated region
        $region41: #{tpu_custom_call.1} parent=31 // pred_check
          %p272 = pneg %p121
        $region42: #{tpu_custom_call.1} parent=31 // pred_check_branch
          %274 = sbr.rel (%p272) target = $region44
        $region43: #{tpu_custom_call.1} parent=31 // pred_region
          %276 = dma.done %s268, 2048
        $region44: #{tpu_custom_call.1} parent=31 // pred_fallthru
          _
        %s277 = sand.u32 %s52, 1
        %s278 = scalar_lea.sflag [#allocation6], %s277
        %s279 = sand.u32 %s52, 1
        %s280 = smul.addr %s279, 128
        %s281 = scalar_lea.vmem [#allocation5], %s280
        %p282 = pneg %p65
        %p283 = pneg %p62
        %s284 = sand.u32 %s23, 1
        %s285 = scalar_lea.sflag [#allocation9], %s284
        %s286 = sand.u32 %s80, 1
        %s287 = smul.addr %s286, 128
        %s288 = scalar_lea.vmem [#allocation8], %s287
        %p289 = pneg %p93
        %p290 = pneg %p90
        %s291 = sand.u32 %s23, 1
        %s292 = scalar_lea.sflag [#allocation9], %s291
        %s293 = sand.u32 %s108, 1
        %s294 = smul.addr %s293, 128
        %s295 = scalar_lea.vmem [#allocation10], %s294
        %p296 = pneg %p121
        %p297 = pneg %p118
        %p298 = pneg %p149
        %p299 = pneg %p146
        %s300 = sand.u32 %s136, 1
        %s301 = scalar_lea.sflag [#allocation7], %s300
        %s302 = sand.u32 %s136, 1
        %s303 = smul.addr %s302, 128
        %s304 = scalar_lea.vmem [#allocation11], %s303
        %s305 = smul.u32 32, %s29
        %s306 = smul.u32 32, %s30
        %s307 = smul.u32 32, %s30
        %s308 = smul.u32 32, %s29
        %p309 = scmp.eq.s32.totalorder %s30, 0
        // Predicated region
        $region45: #{tpu_custom_call.1} parent=31 // pred_check
          %p310 = pneg %p309
        $region46: #{tpu_custom_call.1} parent=31 // pred_check_branch
          %312 = sbr.rel (%p310) target = $region48
        $region47: #{tpu_custom_call.1} parent=31 // pred_region
          %vm313 = vcmask 7168
          %314 = vst.msk [vmem:[#allocation2] sm:$0xff] %vm313, -inf
          %315 = vst.msk [vmem:[#allocation2 + $0x8] sm:$0xff] %vm313, -inf
          %316 = vst.msk [vmem:[#allocation2 + $0x10] sm:$0xff] %vm313, -inf
          %317 = vst.msk [vmem:[#allocation2 + $0x18] sm:$0xff] %vm313, -inf
          %318 = vst.msk [vmem:[#allocation2 + $0x20] sm:$0xff] %vm313, -inf
          %319 = vst.msk [vmem:[#allocation2 + $0x28] sm:$0xff] %vm313, -inf
          %320 = vst.msk [vmem:[#allocation2 + $0x30] sm:$0xff] %vm313, -inf
          %321 = vst.msk [vmem:[#allocation2 + $0x38] sm:$0xff] %vm313, -inf
          %322 = vst.msk [vmem:[#allocation2 + $0x40] sm:$0xff] %vm313, -inf
          %323 = vst.msk [vmem:[#allocation2 + $0x48] sm:$0xff] %vm313, -inf
          %324 = vst.msk [vmem:[#allocation2 + $0x50] sm:$0xff] %vm313, -inf
          %325 = vst.msk [vmem:[#allocation2 + $0x58] sm:$0xff] %vm313, -inf
          %326 = vst.msk [vmem:[#allocation2 + $0x60] sm:$0xff] %vm313, -inf
          %327 = vst.msk [vmem:[#allocation2 + $0x68] sm:$0xff] %vm313, -inf
          %328 = vst.msk [vmem:[#allocation2 + $0x70] sm:$0xff] %vm313, -inf
          %329 = vst.msk [vmem:[#allocation2 + $0x78] sm:$0xff] %vm313, -inf
          %330 = vst.msk [vmem:[#allocation2 + $0x80] sm:$0xff] %vm313, -inf
          %331 = vst.msk [vmem:[#allocation2 + $0x88] sm:$0xff] %vm313, -inf
          %332 = vst.msk [vmem:[#allocation2 + $0x90] sm:$0xff] %vm313, -inf
          %333 = vst.msk [vmem:[#allocation2 + $0x98] sm:$0xff] %vm313, -inf
          %334 = vst.msk [vmem:[#allocation2 + $0xa0] sm:$0xff] %vm313, -inf
          %335 = vst.msk [vmem:[#allocation2 + $0xa8] sm:$0xff] %vm313, -inf
          %336 = vst.msk [vmem:[#allocation2 + $0xb0] sm:$0xff] %vm313, -inf
          %337 = vst.msk [vmem:[#allocation2 + $0xb8] sm:$0xff] %vm313, -inf
          %338 = vst.msk [vmem:[#allocation2 + $0xc0] sm:$0xff] %vm313, -inf
          %339 = vst.msk [vmem:[#allocation2 + $0xc8] sm:$0xff] %vm313, -inf
          %340 = vst.msk [vmem:[#allocation2 + $0xd0] sm:$0xff] %vm313, -inf
          %341 = vst.msk [vmem:[#allocation2 + $0xd8] sm:$0xff] %vm313, -inf
          %342 = vst.msk [vmem:[#allocation2 + $0xe0] sm:$0xff] %vm313, -inf
          %343 = vst.msk [vmem:[#allocation2 + $0xe8] sm:$0xff] %vm313, -inf
          %344 = vst.msk [vmem:[#allocation2 + $0xf0] sm:$0xff] %vm313, -inf
          %345 = vst.msk [vmem:[#allocation2 + $0xf8] sm:$0xff] %vm313, -inf
          %346 = vst.msk [vmem:[#allocation3] sm:$0xff] %vm313, 0.0
          %347 = vst.msk [vmem:[#allocation3 + $0x8] sm:$0xff] %vm313, 0.0
          %348 = vst.msk [vmem:[#allocation3 + $0x10] sm:$0xff] %vm313, 0.0
          %349 = vst.msk [vmem:[#allocation3 + $0x18] sm:$0xff] %vm313, 0.0
          %350 = vst.msk [vmem:[#allocation3 + $0x20] sm:$0xff] %vm313, 0.0
          %351 = vst.msk [vmem:[#allocation3 + $0x28] sm:$0xff] %vm313, 0.0
          %352 = vst.msk [vmem:[#allocation3 + $0x30] sm:$0xff] %vm313, 0.0
          %353 = vst.msk [vmem:[#allocation3 + $0x38] sm:$0xff] %vm313, 0.0
          %354 = vst.msk [vmem:[#allocation3 + $0x40] sm:$0xff] %vm313, 0.0
          %355 = vst.msk [vmem:[#allocation3 + $0x48] sm:$0xff] %vm313, 0.0
          %356 = vst.msk [vmem:[#allocation3 + $0x50] sm:$0xff] %vm313, 0.0
          %357 = vst.msk [vmem:[#allocation3 + $0x58] sm:$0xff] %vm313, 0.0
          %358 = vst.msk [vmem:[#allocation3 + $0x60] sm:$0xff] %vm313, 0.0
          %359 = vst.msk [vmem:[#allocation3 + $0x68] sm:$0xff] %vm313, 0.0
          %360 = vst.msk [vmem:[#allocation3 + $0x70] sm:$0xff] %vm313, 0.0
          %361 = vst.msk [vmem:[#allocation3 + $0x78] sm:$0xff] %vm313, 0.0
          %362 = vst.msk [vmem:[#allocation3 + $0x80] sm:$0xff] %vm313, 0.0
          %363 = vst.msk [vmem:[#allocation3 + $0x88] sm:$0xff] %vm313, 0.0
          %364 = vst.msk [vmem:[#allocation3 + $0x90] sm:$0xff] %vm313, 0.0
          %365 = vst.msk [vmem:[#allocation3 + $0x98] sm:$0xff] %vm313, 0.0
          %366 = vst.msk [vmem:[#allocation3 + $0xa0] sm:$0xff] %vm313, 0.0
          %367 = vst.msk [vmem:[#allocation3 + $0xa8] sm:$0xff] %vm313, 0.0
          %368 = vst.msk [vmem:[#allocation3 + $0xb0] sm:$0xff] %vm313, 0.0
          %369 = vst.msk [vmem:[#allocation3 + $0xb8] sm:$0xff] %vm313, 0.0
          %370 = vst.msk [vmem:[#allocation3 + $0xc0] sm:$0xff] %vm313, 0.0
          %371 = vst.msk [vmem:[#allocation3 + $0xc8] sm:$0xff] %vm313, 0.0
          %372 = vst.msk [vmem:[#allocation3 + $0xd0] sm:$0xff] %vm313, 0.0
          %373 = vst.msk [vmem:[#allocation3 + $0xd8] sm:$0xff] %vm313, 0.0
          %374 = vst.msk [vmem:[#allocation3 + $0xe0] sm:$0xff] %vm313, 0.0
          %375 = vst.msk [vmem:[#allocation3 + $0xe8] sm:$0xff] %vm313, 0.0
          %376 = vst.msk [vmem:[#allocation3 + $0xf0] sm:$0xff] %vm313, 0.0
          %377 = vst.msk [vmem:[#allocation3 + $0xf8] sm:$0xff] %vm313, 0.0
          %378 = vst [vmem:[#allocation4] sm:$0xff] 0.0
          %379 = vst [vmem:[#allocation4 + $0x8] sm:$0xff] 0.0
          %380 = vst [vmem:[#allocation4 + $0x10] sm:$0xff] 0.0
          %381 = vst [vmem:[#allocation4 + $0x18] sm:$0xff] 0.0
          %382 = vst [vmem:[#allocation4 + $0x20] sm:$0xff] 0.0
          %383 = vst [vmem:[#allocation4 + $0x28] sm:$0xff] 0.0
          %384 = vst [vmem:[#allocation4 + $0x30] sm:$0xff] 0.0
          %385 = vst [vmem:[#allocation4 + $0x38] sm:$0xff] 0.0
          %386 = vst [vmem:[#allocation4 + $0x40] sm:$0xff] 0.0
          %387 = vst [vmem:[#allocation4 + $0x48] sm:$0xff] 0.0
          %388 = vst [vmem:[#allocation4 + $0x50] sm:$0xff] 0.0
          %389 = vst [vmem:[#allocation4 + $0x58] sm:$0xff] 0.0
          %390 = vst [vmem:[#allocation4 + $0x60] sm:$0xff] 0.0
          %391 = vst [vmem:[#allocation4 + $0x68] sm:$0xff] 0.0
          %392 = vst [vmem:[#allocation4 + $0x70] sm:$0xff] 0.0
          %393 = vst [vmem:[#allocation4 + $0x78] sm:$0xff] 0.0
          %394 = vst [vmem:[#allocation4 + $0x80] sm:$0xff] 0.0
          %395 = vst [vmem:[#allocation4 + $0x88] sm:$0xff] 0.0
          %396 = vst [vmem:[#allocation4 + $0x90] sm:$0xff] 0.0
          %397 = vst [vmem:[#allocation4 + $0x98] sm:$0xff] 0.0
          %398 = vst [vmem:[#allocation4 + $0xa0] sm:$0xff] 0.0
          %399 = vst [vmem:[#allocation4 + $0xa8] sm:$0xff] 0.0
          %400 = vst [vmem:[#allocation4 + $0xb0] sm:$0xff] 0.0
          %401 = vst [vmem:[#allocation4 + $0xb8] sm:$0xff] 0.0
          %402 = vst [vmem:[#allocation4 + $0xc0] sm:$0xff] 0.0
          %403 = vst [vmem:[#allocation4 + $0xc8] sm:$0xff] 0.0
          %404 = vst [vmem:[#allocation4 + $0xd0] sm:$0xff] 0.0
          %405 = vst [vmem:[#allocation4 + $0xd8] sm:$0xff] 0.0
          %406 = vst [vmem:[#allocation4 + $0xe0] sm:$0xff] 0.0
          %407 = vst [vmem:[#allocation4 + $0xe8] sm:$0xff] 0.0
          %408 = vst [vmem:[#allocation4 + $0xf0] sm:$0xff] 0.0
          %409 = vst [vmem:[#allocation4 + $0xf8] sm:$0xff] 0.0
        $region48: #{tpu_custom_call.1} parent=31 // pred_fallthru
          _
        %v410 = vld [vmem:[%s251] sm:$0xf]
        %v411 = vld [vmem:[%s251 + $0x4] sm:$0xf]
        %v412 = vld [vmem:[%s251 + $0x8] sm:$0xf]
        %v413 = vld [vmem:[%s251 + $0xc] sm:$0xf]
        %v414 = vld [vmem:[%s251 + $0x10] sm:$0xf]
        %v415 = vld [vmem:[%s251 + $0x14] sm:$0xf]
        %v416 = vld [vmem:[%s251 + $0x18] sm:$0xf]
        %v417 = vld [vmem:[%s251 + $0x1c] sm:$0xf]
        %v418 = vld [vmem:[%s251 + $0x20] sm:$0xf]
        %v419 = vld [vmem:[%s251 + $0x24] sm:$0xf]
        %v420 = vld [vmem:[%s251 + $0x28] sm:$0xf]
        %v421 = vld [vmem:[%s251 + $0x2c] sm:$0xf]
        %v422 = vld [vmem:[%s251 + $0x30] sm:$0xf]
        %v423 = vld [vmem:[%s251 + $0x34] sm:$0xf]
        %v424 = vld [vmem:[%s251 + $0x38] sm:$0xf]
        %v425 = vld [vmem:[%s251 + $0x3c] sm:$0xf]
        %v426 = vld [vmem:[%s251 + $0x40] sm:$0xf]
        %v427 = vld [vmem:[%s251 + $0x44] sm:$0xf]
        %v428 = vld [vmem:[%s251 + $0x48] sm:$0xf]
        %v429 = vld [vmem:[%s251 + $0x4c] sm:$0xf]
        %v430 = vld [vmem:[%s251 + $0x50] sm:$0xf]
        %v431 = vld [vmem:[%s251 + $0x54] sm:$0xf]
        %v432 = vld [vmem:[%s251 + $0x58] sm:$0xf]
        %v433 = vld [vmem:[%s251 + $0x5c] sm:$0xf]
        %v434 = vld [vmem:[%s251 + $0x60] sm:$0xf]
        %v435 = vld [vmem:[%s251 + $0x64] sm:$0xf]
        %v436 = vld [vmem:[%s251 + $0x68] sm:$0xf]
        %v437 = vld [vmem:[%s251 + $0x6c] sm:$0xf]
        %v438 = vld [vmem:[%s251 + $0x70] sm:$0xf]
        %v439 = vld [vmem:[%s251 + $0x74] sm:$0xf]
        %v440 = vld [vmem:[%s251 + $0x78] sm:$0xf]
        %v441 = vld [vmem:[%s251 + $0x7c] sm:$0xf]
        %v442 = vunpack.c.l.bf16 %v410
        %v443 = vunpack.c.l.bf16 %v411
        %v444 = vunpack.c.l.bf16 %v412
        %v445 = vunpack.c.l.bf16 %v413
        %v446 = vunpack.c.l.bf16 %v414
        %v447 = vunpack.c.l.bf16 %v415
        %v448 = vunpack.c.l.bf16 %v416
        %v449 = vunpack.c.l.bf16 %v417
        %v450 = vunpack.c.l.bf16 %v418
        %v451 = vunpack.c.l.bf16 %v419
        %v452 = vunpack.c.l.bf16 %v420
        %v453 = vunpack.c.l.bf16 %v421
        %v454 = vunpack.c.l.bf16 %v422
        %v455 = vunpack.c.l.bf16 %v423
        %v456 = vunpack.c.l.bf16 %v424
        %v457 = vunpack.c.l.bf16 %v425
        %v458 = vunpack.c.l.bf16 %v426
        %v459 = vunpack.c.l.bf16 %v427
        %v460 = vunpack.c.l.bf16 %v428
        %v461 = vunpack.c.l.bf16 %v429
        %v462 = vunpack.c.l.bf16 %v430
        %v463 = vunpack.c.l.bf16 %v431
        %v464 = vunpack.c.l.bf16 %v432
        %v465 = vunpack.c.l.bf16 %v433
        %v466 = vunpack.c.l.bf16 %v434
        %v467 = vunpack.c.l.bf16 %v435
        %v468 = vunpack.c.l.bf16 %v436
        %v469 = vunpack.c.l.bf16 %v437
        %v470 = vunpack.c.l.bf16 %v438
        %v471 = vunpack.c.l.bf16 %v439
        %v472 = vunpack.c.l.bf16 %v440
        %v473 = vunpack.c.l.bf16 %v441
        %v474 = vmul.f32 %v442, 0.088388346
        %v475 = vmul.f32 %v443, 0.088388346
        %v476 = vmul.f32 %v444, 0.088388346
        %v477 = vmul.f32 %v445, 0.088388346
        %v478 = vmul.f32 %v446, 0.088388346
        %v479 = vmul.f32 %v447, 0.088388346
        %v480 = vmul.f32 %v448, 0.088388346
        %v481 = vmul.f32 %v449, 0.088388346
        %v482 = vmul.f32 %v450, 0.088388346
        %v483 = vmul.f32 %v451, 0.088388346
        %v484 = vmul.f32 %v452, 0.088388346
        %v485 = vmul.f32 %v453, 0.088388346
        %v486 = vmul.f32 %v454, 0.088388346
        %v487 = vmul.f32 %v455, 0.088388346
        %v488 = vmul.f32 %v456, 0.088388346
        %v489 = vmul.f32 %v457, 0.088388346
        %v490 = vmul.f32 %v458, 0.088388346
        %v491 = vmul.f32 %v459, 0.088388346
        %v492 = vmul.f32 %v460, 0.088388346
        %v493 = vmul.f32 %v461, 0.088388346
        %v494 = vmul.f32 %v462, 0.088388346
        %v495 = vmul.f32 %v463, 0.088388346
        %v496 = vmul.f32 %v464, 0.088388346
        %v497 = vmul.f32 %v465, 0.088388346
        %v498 = vmul.f32 %v466, 0.088388346
        %v499 = vmul.f32 %v467, 0.088388346
        %v500 = vmul.f32 %v468, 0.088388346
        %v501 = vmul.f32 %v469, 0.088388346
        %v502 = vmul.f32 %v470, 0.088388346
        %v503 = vmul.f32 %v471, 0.088388346
        %v504 = vmul.f32 %v472, 0.088388346
        %v505 = vmul.f32 %v473, 0.088388346
        %v506 = vpack.c.bf16 %v475, %v474
        %v507 = vpack.c.bf16 %v477, %v476
        %v508 = vpack.c.bf16 %v479, %v478
        %v509 = vpack.c.bf16 %v481, %v480
        %v510 = vpack.c.bf16 %v483, %v482
        %v511 = vpack.c.bf16 %v485, %v484
        %v512 = vpack.c.bf16 %v487, %v486
        %v513 = vpack.c.bf16 %v489, %v488
        %v514 = vpack.c.bf16 %v491, %v490
        %v515 = vpack.c.bf16 %v493, %v492
        %v516 = vpack.c.bf16 %v495, %v494
        %v517 = vpack.c.bf16 %v497, %v496
        %v518 = vpack.c.bf16 %v499, %v498
        %v519 = vpack.c.bf16 %v501, %v500
        %v520 = vpack.c.bf16 %v503, %v502
        %v521 = vpack.c.bf16 %v505, %v504
        %v522 = vld [vmem:[%s261] sm:$0xf]
        %v523 = vld [vmem:[%s261 + $0x4] sm:$0xf]
        %v524 = vld [vmem:[%s261 + $0x8] sm:$0xf]
        %v525 = vld [vmem:[%s261 + $0xc] sm:$0xf]
        %v526 = vld [vmem:[%s261 + $0x10] sm:$0xf]
        %v527 = vld [vmem:[%s261 + $0x14] sm:$0xf]
        %v528 = vld [vmem:[%s261 + $0x18] sm:$0xf]
        %v529 = vld [vmem:[%s261 + $0x1c] sm:$0xf]
        %v530 = vld [vmem:[%s261 + $0x20] sm:$0xf]
        %v531 = vld [vmem:[%s261 + $0x24] sm:$0xf]
        %v532 = vld [vmem:[%s261 + $0x28] sm:$0xf]
        %v533 = vld [vmem:[%s261 + $0x2c] sm:$0xf]
        %v534 = vld [vmem:[%s261 + $0x30] sm:$0xf]
        %v535 = vld [vmem:[%s261 + $0x34] sm:$0xf]
        %v536 = vld [vmem:[%s261 + $0x38] sm:$0xf]
        %v537 = vld [vmem:[%s261 + $0x3c] sm:$0xf]
        %v538 = vld [vmem:[%s261 + $0x40] sm:$0xf]
        %v539 = vld [vmem:[%s261 + $0x44] sm:$0xf]
        %v540 = vld [vmem:[%s261 + $0x48] sm:$0xf]
        %v541 = vld [vmem:[%s261 + $0x4c] sm:$0xf]
        %v542 = vld [vmem:[%s261 + $0x50] sm:$0xf]
        %v543 = vld [vmem:[%s261 + $0x54] sm:$0xf]
        %v544 = vld [vmem:[%s261 + $0x58] sm:$0xf]
        %v545 = vld [vmem:[%s261 + $0x5c] sm:$0xf]
        %v546 = vld [vmem:[%s261 + $0x60] sm:$0xf]
        %v547 = vld [vmem:[%s261 + $0x64] sm:$0xf]
        %v548 = vld [vmem:[%s261 + $0x68] sm:$0xf]
        %v549 = vld [vmem:[%s261 + $0x6c] sm:$0xf]
        %v550 = vld [vmem:[%s261 + $0x70] sm:$0xf]
        %v551 = vld [vmem:[%s261 + $0x74] sm:$0xf]
        %v552 = vld [vmem:[%s261 + $0x78] sm:$0xf]
        %v553 = vld [vmem:[%s261 + $0x7c] sm:$0xf]
        %v554 = vld [vmem:[%s271] sm:$0xf]
        %v555 = vld [vmem:[%s271 + $0x4] sm:$0xf]
        %v556 = vld [vmem:[%s271 + $0x8] sm:$0xf]
        %v557 = vld [vmem:[%s271 + $0xc] sm:$0xf]
        %v558 = vld [vmem:[%s271 + $0x10] sm:$0xf]
        %v559 = vld [vmem:[%s271 + $0x14] sm:$0xf]
        %v560 = vld [vmem:[%s271 + $0x18] sm:$0xf]
        %v561 = vld [vmem:[%s271 + $0x1c] sm:$0xf]
        %v562 = vld [vmem:[%s271 + $0x20] sm:$0xf]
        %v563 = vld [vmem:[%s271 + $0x24] sm:$0xf]
        %v564 = vld [vmem:[%s271 + $0x28] sm:$0xf]
        %v565 = vld [vmem:[%s271 + $0x2c] sm:$0xf]
        %v566 = vld [vmem:[%s271 + $0x30] sm:$0xf]
        %v567 = vld [vmem:[%s271 + $0x34] sm:$0xf]
        %v568 = vld [vmem:[%s271 + $0x38] sm:$0xf]
        %v569 = vld [vmem:[%s271 + $0x3c] sm:$0xf]
        %v570 = vld [vmem:[%s271 + $0x40] sm:$0xf]
        %v571 = vld [vmem:[%s271 + $0x44] sm:$0xf]
        %v572 = vld [vmem:[%s271 + $0x48] sm:$0xf]
        %v573 = vld [vmem:[%s271 + $0x4c] sm:$0xf]
        %v574 = vld [vmem:[%s271 + $0x50] sm:$0xf]
        %v575 = vld [vmem:[%s271 + $0x54] sm:$0xf]
        %v576 = vld [vmem:[%s271 + $0x58] sm:$0xf]
        %v577 = vld [vmem:[%s271 + $0x5c] sm:$0xf]
        %v578 = vld [vmem:[%s271 + $0x60] sm:$0xf]
        %v579 = vld [vmem:[%s271 + $0x64] sm:$0xf]
        %v580 = vld [vmem:[%s271 + $0x68] sm:$0xf]
        %v581 = vld [vmem:[%s271 + $0x6c] sm:$0xf]
        %v582 = vld [vmem:[%s271 + $0x70] sm:$0xf]
        %v583 = vld [vmem:[%s271 + $0x74] sm:$0xf]
        %v584 = vld [vmem:[%s271 + $0x78] sm:$0xf]
        %v585 = vld [vmem:[%s271 + $0x7c] sm:$0xf]
        %v618 = vunpack.c.l.b16 %v522
        %v619 = vunpack.c.l.b16 %v523
        %v620 = vunpack.c.l.b16 %v524
        %v621 = vunpack.c.l.b16 %v525
        %v622 = vunpack.c.l.b16 %v526
        %v623 = vunpack.c.l.b16 %v527
        %v624 = vunpack.c.l.b16 %v528
        %v625 = vunpack.c.l.b16 %v529
        %v626 = vunpack.c.l.b16 %v530
        %v627 = vunpack.c.l.b16 %v531
        %v628 = vunpack.c.l.b16 %v532
        %v629 = vunpack.c.l.b16 %v533
        %v630 = vunpack.c.l.b16 %v534
        %v631 = vunpack.c.l.b16 %v535
        %v632 = vunpack.c.l.b16 %v536
        %v633 = vunpack.c.l.b16 %v537
        %v634 = vunpack.c.l.b16 %v538
        %v635 = vunpack.c.l.b16 %v539
        %v636 = vunpack.c.l.b16 %v540
        %v637 = vunpack.c.l.b16 %v541
        %v638 = vunpack.c.l.b16 %v542
        %v639 = vunpack.c.l.b16 %v543
        %v640 = vunpack.c.l.b16 %v544
        %v641 = vunpack.c.l.b16 %v545
        %v642 = vunpack.c.l.b16 %v546
        %v643 = vunpack.c.l.b16 %v547
        %v644 = vunpack.c.l.b16 %v548
        %v645 = vunpack.c.l.b16 %v549
        %v646 = vunpack.c.l.b16 %v550
        %v647 = vunpack.c.l.b16 %v551
        %v648 = vunpack.c.l.b16 %v552
        %v649 = vunpack.c.l.b16 %v553
        %v650 = vpack.c.b16 %v619, %v618
        %v651 = vpack.c.b16 %v621, %v620
        %v652 = vpack.c.b16 %v623, %v622
        %v653 = vpack.c.b16 %v625, %v624
        %v654 = vpack.c.b16 %v627, %v626
        %v655 = vpack.c.b16 %v629, %v628
        %v656 = vpack.c.b16 %v631, %v630
        %v657 = vpack.c.b16 %v633, %v632
        %v658 = vpack.c.b16 %v635, %v634
        %v659 = vpack.c.b16 %v637, %v636
        %v660 = vpack.c.b16 %v639, %v638
        %v661 = vpack.c.b16 %v641, %v640
        %v662 = vpack.c.b16 %v643, %v642
        %v663 = vpack.c.b16 %v645, %v644
        %v664 = vpack.c.b16 %v647, %v646
        %v665 = vpack.c.b16 %v649, %v648
        %682 = vmatpush.bf16.xpose.msra.mxu0 %v657
        %683 = vmatpush.bf16.xpose.msra.mxu0 %v656
        %684 = vmatpush.bf16.xpose.msra.mxu0 %v655
        %685 = vmatpush.bf16.xpose.msra.mxu0 %v654
        %686 = vmatpush.bf16.xpose.msra.mxu0 %v653
        %687 = vmatpush.bf16.xpose.msra.mxu0 %v652
        %688 = vmatpush.bf16.xpose.msra.mxu0 %v651
        %689 = vmatpush.bf16.xpose.msra.mxu0 %v650
        %690 = vmatmul.bf16.gmra.mxu0 %v506
        %v691 = vpop.f32.mrf.mxu0
        %v692 = vadd.f32 0.0, %v691
        %v693 = vpop.f32.mrf.mxu0
        %v694 = vadd.f32 0.0, %v693
        %695 = vmatmul.bf16.gmra.mxu0 %v507
        %v696 = vpop.f32.mrf.mxu0
        %v697 = vadd.f32 0.0, %v696
        %v698 = vpop.f32.mrf.mxu0
        %v699 = vadd.f32 0.0, %v698
        %700 = vmatmul.bf16.gmra.mxu0 %v508
        %v701 = vpop.f32.mrf.mxu0
        %v702 = vadd.f32 0.0, %v701
        %v703 = vpop.f32.mrf.mxu0
        %v704 = vadd.f32 0.0, %v703
        %705 = vmatmul.bf16.gmra.mxu0 %v509
        %v706 = vpop.f32.mrf.mxu0
        %v707 = vadd.f32 0.0, %v706
        %v708 = vpop.f32.mrf.mxu0
        %v709 = vadd.f32 0.0, %v708
        %710 = vmatmul.bf16.gmra.mxu0 %v510
        %v711 = vpop.f32.mrf.mxu0
        %v712 = vadd.f32 0.0, %v711
        %v713 = vpop.f32.mrf.mxu0
        %v714 = vadd.f32 0.0, %v713
        %715 = vmatmul.bf16.gmra.mxu0 %v511
        %v716 = vpop.f32.mrf.mxu0
        %v717 = vadd.f32 0.0, %v716
        %v718 = vpop.f32.mrf.mxu0
        %v719 = vadd.f32 0.0, %v718
        %720 = vmatmul.bf16.gmra.mxu0 %v512
        %v721 = vpop.f32.mrf.mxu0
        %v722 = vadd.f32 0.0, %v721
        %v723 = vpop.f32.mrf.mxu0
        %v724 = vadd.f32 0.0, %v723
        %725 = vmatmul.bf16.gmra.mxu0 %v513
        %v726 = vpop.f32.mrf.mxu0
        %v727 = vadd.f32 0.0, %v726
        %v728 = vpop.f32.mrf.mxu0
        %v729 = vadd.f32 0.0, %v728
        %730 = vmatmul.bf16.gmra.mxu0 %v514
        %v731 = vpop.f32.mrf.mxu0
        %v732 = vadd.f32 0.0, %v731
        %v733 = vpop.f32.mrf.mxu0
        %v734 = vadd.f32 0.0, %v733
        %735 = vmatmul.bf16.gmra.mxu0 %v515
        %v736 = vpop.f32.mrf.mxu0
        %v737 = vadd.f32 0.0, %v736
        %v738 = vpop.f32.mrf.mxu0
        %v739 = vadd.f32 0.0, %v738
        %740 = vmatmul.bf16.gmra.mxu0 %v516
        %v741 = vpop.f32.mrf.mxu0
        %v742 = vadd.f32 0.0, %v741
        %v743 = vpop.f32.mrf.mxu0
        %v744 = vadd.f32 0.0, %v743
        %745 = vmatmul.bf16.gmra.mxu0 %v517
        %v746 = vpop.f32.mrf.mxu0
        %v747 = vadd.f32 0.0, %v746
        %v748 = vpop.f32.mrf.mxu0
        %v749 = vadd.f32 0.0, %v748
        %750 = vmatmul.bf16.gmra.mxu0 %v518
        %v751 = vpop.f32.mrf.mxu0
        %v752 = vadd.f32 0.0, %v751
        %v753 = vpop.f32.mrf.mxu0
        %v754 = vadd.f32 0.0, %v753
        %755 = vmatmul.bf16.gmra.mxu0 %v519
        %v756 = vpop.f32.mrf.mxu0
        %v757 = vadd.f32 0.0, %v756
        %v758 = vpop.f32.mrf.mxu0
        %v759 = vadd.f32 0.0, %v758
        %760 = vmatmul.bf16.gmra.mxu0 %v520
        %v761 = vpop.f32.mrf.mxu0
        %v762 = vadd.f32 0.0, %v761
        %v763 = vpop.f32.mrf.mxu0
        %v764 = vadd.f32 0.0, %v763
        %765 = vmatmul.bf16.gmra.mxu0 %v521
        %v766 = vpop.f32.mrf.mxu0
        %v767 = vadd.f32 0.0, %v766
        %v768 = vpop.f32.mrf.mxu0
        %v769 = vadd.f32 0.0, %v768
        %770 = vdwg.mxu0
        %771 = vmatpush.bf16.xpose.msra.mxu0 %v665
        %772 = vmatpush.bf16.xpose.msra.mxu0 %v664
        %773 = vmatpush.bf16.xpose.msra.mxu0 %v663
        %774 = vmatpush.bf16.xpose.msra.mxu0 %v662
        %775 = vmatpush.bf16.xpose.msra.mxu0 %v661
        %776 = vmatpush.bf16.xpose.msra.mxu0 %v660
        %777 = vmatpush.bf16.xpose.msra.mxu0 %v659
        %778 = vmatpush.bf16.xpose.msra.mxu0 %v658
        %779 = vmatmul.bf16.gmra.mxu0 %v506
        %v780 = vpop.f32.mrf.mxu0
        %v781 = vadd.f32 0.0, %v780
        %v782 = vpop.f32.mrf.mxu0
        %v783 = vadd.f32 0.0, %v782
        %784 = vmatmul.bf16.gmra.mxu0 %v507
        %v785 = vpop.f32.mrf.mxu0
        %v786 = vadd.f32 0.0, %v785
        %v787 = vpop.f32.mrf.mxu0
        %v788 = vadd.f32 0.0, %v787
        %789 = vmatmul.bf16.gmra.mxu0 %v508
        %v790 = vpop.f32.mrf.mxu0
        %v791 = vadd.f32 0.0, %v790
        %v792 = vpop.f32.mrf.mxu0
        %v793 = vadd.f32 0.0, %v792
        %794 = vmatmul.bf16.gmra.mxu0 %v509
        %v795 = vpop.f32.mrf.mxu0
        %v796 = vadd.f32 0.0, %v795
        %v797 = vpop.f32.mrf.mxu0
        %v798 = vadd.f32 0.0, %v797
        %799 = vmatmul.bf16.gmra.mxu0 %v510
        %v800 = vpop.f32.mrf.mxu0
        %v801 = vadd.f32 0.0, %v800
        %v802 = vpop.f32.mrf.mxu0
        %v803 = vadd.f32 0.0, %v802
        %804 = vmatmul.bf16.gmra.mxu0 %v511
        %v805 = vpop.f32.mrf.mxu0
        %v806 = vadd.f32 0.0, %v805
        %v807 = vpop.f32.mrf.mxu0
        %v808 = vadd.f32 0.0, %v807
        %809 = vmatmul.bf16.gmra.mxu0 %v512
        %v810 = vpop.f32.mrf.mxu0
        %v811 = vadd.f32 0.0, %v810
        %v812 = vpop.f32.mrf.mxu0
        %v813 = vadd.f32 0.0, %v812
        %814 = vmatmul.bf16.gmra.mxu0 %v513
        %v815 = vpop.f32.mrf.mxu0
        %v816 = vadd.f32 0.0, %v815
        %v817 = vpop.f32.mrf.mxu0
        %v818 = vadd.f32 0.0, %v817
        %819 = vmatmul.bf16.gmra.mxu0 %v514
        %v820 = vpop.f32.mrf.mxu0
        %v821 = vadd.f32 0.0, %v820
        %v822 = vpop.f32.mrf.mxu0
        %v823 = vadd.f32 0.0, %v822
        %824 = vmatmul.bf16.gmra.mxu0 %v515
        %v825 = vpop.f32.mrf.mxu0
        %v826 = vadd.f32 0.0, %v825
        %v827 = vpop.f32.mrf.mxu0
        %v828 = vadd.f32 0.0, %v827
        %829 = vmatmul.bf16.gmra.mxu0 %v516
        %v830 = vpop.f32.mrf.mxu0
        %v831 = vadd.f32 0.0, %v830
        %v832 = vpop.f32.mrf.mxu0
        %v833 = vadd.f32 0.0, %v832
        %834 = vmatmul.bf16.gmra.mxu0 %v517
        %v835 = vpop.f32.mrf.mxu0
        %v836 = vadd.f32 0.0, %v835
        %v837 = vpop.f32.mrf.mxu0
        %v838 = vadd.f32 0.0, %v837
        %839 = vmatmul.bf16.gmra.mxu0 %v518
        %v840 = vpop.f32.mrf.mxu0
        %v841 = vadd.f32 0.0, %v840
        %v842 = vpop.f32.mrf.mxu0
        %v843 = vadd.f32 0.0, %v842
        %844 = vmatmul.bf16.gmra.mxu0 %v519
        %v845 = vpop.f32.mrf.mxu0
        %v846 = vadd.f32 0.0, %v845
        %v847 = vpop.f32.mrf.mxu0
        %v848 = vadd.f32 0.0, %v847
        %849 = vmatmul.bf16.gmra.mxu0 %v520
        %v850 = vpop.f32.mrf.mxu0
        %v851 = vadd.f32 0.0, %v850
        %v852 = vpop.f32.mrf.mxu0
        %v853 = vadd.f32 0.0, %v852
        %854 = vmatmul.bf16.gmra.mxu0 %v521
        %v855 = vpop.f32.mrf.mxu0
        %v856 = vadd.f32 0.0, %v855
        %v857 = vpop.f32.mrf.mxu0
        %v858 = vadd.f32 0.0, %v857
        %859 = vdwg.mxu0
        %v860 = vld [vmem:[#allocation2] sm:$0xff]
        %v861 = vld [vmem:[#allocation2 + $0x8] sm:$0xff]
        %v862 = vld [vmem:[#allocation2 + $0x10] sm:$0xff]
        %v863 = vld [vmem:[#allocation2 + $0x18] sm:$0xff]
        %v864 = vld [vmem:[#allocation2 + $0x20] sm:$0xff]
        %v865 = vld [vmem:[#allocation2 + $0x28] sm:$0xff]
        %v866 = vld [vmem:[#allocation2 + $0x30] sm:$0xff]
        %v867 = vld [vmem:[#allocation2 + $0x38] sm:$0xff]
        %v868 = vld [vmem:[#allocation2 + $0x40] sm:$0xff]
        %v869 = vld [vmem:[#allocation2 + $0x48] sm:$0xff]
        %v870 = vld [vmem:[#allocation2 + $0x50] sm:$0xff]
        %v871 = vld [vmem:[#allocation2 + $0x58] sm:$0xff]
        %v872 = vld [vmem:[#allocation2 + $0x60] sm:$0xff]
        %v873 = vld [vmem:[#allocation2 + $0x68] sm:$0xff]
        %v874 = vld [vmem:[#allocation2 + $0x70] sm:$0xff]
        %v875 = vld [vmem:[#allocation2 + $0x78] sm:$0xff]
        %v876 = vld [vmem:[#allocation2 + $0x80] sm:$0xff]
        %v877 = vld [vmem:[#allocation2 + $0x88] sm:$0xff]
        %v878 = vld [vmem:[#allocation2 + $0x90] sm:$0xff]
        %v879 = vld [vmem:[#allocation2 + $0x98] sm:$0xff]
        %v880 = vld [vmem:[#allocation2 + $0xa0] sm:$0xff]
        %v881 = vld [vmem:[#allocation2 + $0xa8] sm:$0xff]
        %v882 = vld [vmem:[#allocation2 + $0xb0] sm:$0xff]
        %v883 = vld [vmem:[#allocation2 + $0xb8] sm:$0xff]
        %v884 = vld [vmem:[#allocation2 + $0xc0] sm:$0xff]
        %v885 = vld [vmem:[#allocation2 + $0xc8] sm:$0xff]
        %v886 = vld [vmem:[#allocation2 + $0xd0] sm:$0xff]
        %v887 = vld [vmem:[#allocation2 + $0xd8] sm:$0xff]
        %v888 = vld [vmem:[#allocation2 + $0xe0] sm:$0xff]
        %v889 = vld [vmem:[#allocation2 + $0xe8] sm:$0xff]
        %v890 = vld [vmem:[#allocation2 + $0xf0] sm:$0xff]
        %v891 = vld [vmem:[#allocation2 + $0xf8] sm:$0xff]
        %v892 = vmax.f32 %v692, %v781
        %893 = vmax.xlane.f32.xlu0 %v892
        %v894 = vpop.xlane.xlu0 %893
        %v895 = vmax.f32 %v694, %v783
        %896 = vmax.xlane.f32.xlu0 %v895
        %v897 = vpop.xlane.xlu0 %896
        %v898 = vmax.f32 %v697, %v786
        %899 = vmax.xlane.f32.xlu0 %v898
        %v900 = vpop.xlane.xlu0 %899
        %v901 = vmax.f32 %v699, %v788
        %902 = vmax.xlane.f32.xlu0 %v901
        %v903 = vpop.xlane.xlu0 %902
        %v904 = vmax.f32 %v702, %v791
        %905 = vmax.xlane.f32.xlu0 %v904
        %v906 = vpop.xlane.xlu0 %905
        %v907 = vmax.f32 %v704, %v793
        %908 = vmax.xlane.f32.xlu0 %v907
        %v909 = vpop.xlane.xlu0 %908
        %v910 = vmax.f32 %v707, %v796
        %911 = vmax.xlane.f32.xlu0 %v910
        %v912 = vpop.xlane.xlu0 %911
        %v913 = vmax.f32 %v709, %v798
        %914 = vmax.xlane.f32.xlu0 %v913
        %v915 = vpop.xlane.xlu0 %914
        %v916 = vmax.f32 %v712, %v801
        %917 = vmax.xlane.f32.xlu0 %v916
        %v918 = vpop.xlane.xlu0 %917
        %v919 = vmax.f32 %v714, %v803
        %920 = vmax.xlane.f32.xlu0 %v919
        %v921 = vpop.xlane.xlu0 %920
        %v922 = vmax.f32 %v717, %v806
        %923 = vmax.xlane.f32.xlu0 %v922
        %v924 = vpop.xlane.xlu0 %923
        %v925 = vmax.f32 %v719, %v808
        %926 = vmax.xlane.f32.xlu0 %v925
        %v927 = vpop.xlane.xlu0 %926
        %v928 = vmax.f32 %v722, %v811
        %929 = vmax.xlane.f32.xlu0 %v928
        %v930 = vpop.xlane.xlu0 %929
        %v931 = vmax.f32 %v724, %v813
        %932 = vmax.xlane.f32.xlu0 %v931
        %v933 = vpop.xlane.xlu0 %932
        %v934 = vmax.f32 %v727, %v816
        %935 = vmax.xlane.f32.xlu0 %v934
        %v936 = vpop.xlane.xlu0 %935
        %v937 = vmax.f32 %v729, %v818
        %938 = vmax.xlane.f32.xlu0 %v937
        %v939 = vpop.xlane.xlu0 %938
        %v940 = vmax.f32 %v732, %v821
        %941 = vmax.xlane.f32.xlu0 %v940
        %v942 = vpop.xlane.xlu0 %941
        %v943 = vmax.f32 %v734, %v823
        %944 = vmax.xlane.f32.xlu0 %v943
        %v945 = vpop.xlane.xlu0 %944
        %v946 = vmax.f32 %v737, %v826
        %947 = vmax.xlane.f32.xlu0 %v946
        %v948 = vpop.xlane.xlu0 %947
        %v949 = vmax.f32 %v739, %v828
        %950 = vmax.xlane.f32.xlu0 %v949
        %v951 = vpop.xlane.xlu0 %950
        %v952 = vmax.f32 %v742, %v831
        %953 = vmax.xlane.f32.xlu0 %v952
        %v954 = vpop.xlane.xlu0 %953
        %v955 = vmax.f32 %v744, %v833
        %956 = vmax.xlane.f32.xlu0 %v955
        %v957 = vpop.xlane.xlu0 %956
        %v958 = vmax.f32 %v747, %v836
        %959 = vmax.xlane.f32.xlu0 %v958
        %v960 = vpop.xlane.xlu0 %959
        %v961 = vmax.f32 %v749, %v838
        %962 = vmax.xlane.f32.xlu0 %v961
        %v963 = vpop.xlane.xlu0 %962
        %v964 = vmax.f32 %v752, %v841
        %965 = vmax.xlane.f32.xlu0 %v964
        %v966 = vpop.xlane.xlu0 %965
        %v967 = vmax.f32 %v754, %v843
        %968 = vmax.xlane.f32.xlu0 %v967
        %v969 = vpop.xlane.xlu0 %968
        %v970 = vmax.f32 %v757, %v846
        %971 = vmax.xlane.f32.xlu0 %v970
        %v972 = vpop.xlane.xlu0 %971
        %v973 = vmax.f32 %v759, %v848
        %974 = vmax.xlane.f32.xlu0 %v973
        %v975 = vpop.xlane.xlu0 %974
        %v976 = vmax.f32 %v762, %v851
        %977 = vmax.xlane.f32.xlu0 %v976
        %v978 = vpop.xlane.xlu0 %977
        %v979 = vmax.f32 %v764, %v853
        %980 = vmax.xlane.f32.xlu0 %v979
        %v981 = vpop.xlane.xlu0 %980
        %v982 = vmax.f32 %v767, %v856
        %983 = vmax.xlane.f32.xlu0 %v982
        %v984 = vpop.xlane.xlu0 %983
        %v985 = vmax.f32 %v769, %v858
        %986 = vmax.xlane.f32.xlu0 %v985
        %v987 = vpop.xlane.xlu0 %986
        %v988 = vmax.f32 %v860, %v894
        %v989 = vmax.f32 %v861, %v897
        %v990 = vmax.f32 %v862, %v900
        %v991 = vmax.f32 %v863, %v903
        %v992 = vmax.f32 %v864, %v906
        %v993 = vmax.f32 %v865, %v909
        %v994 = vmax.f32 %v866, %v912
        %v995 = vmax.f32 %v867, %v915
        %v996 = vmax.f32 %v868, %v918
        %v997 = vmax.f32 %v869, %v921
        %v998 = vmax.f32 %v870, %v924
        %v999 = vmax.f32 %v871, %v927
        %v1000 = vmax.f32 %v872, %v930
        %v1001 = vmax.f32 %v873, %v933
        %v1002 = vmax.f32 %v874, %v936
        %v1003 = vmax.f32 %v875, %v939
        %v1004 = vmax.f32 %v876, %v942
        %v1005 = vmax.f32 %v877, %v945
        %v1006 = vmax.f32 %v878, %v948
        %v1007 = vmax.f32 %v879, %v951
        %v1008 = vmax.f32 %v880, %v954
        %v1009 = vmax.f32 %v881, %v957
        %v1010 = vmax.f32 %v882, %v960
        %v1011 = vmax.f32 %v883, %v963
        %v1012 = vmax.f32 %v884, %v966
        %v1013 = vmax.f32 %v885, %v969
        %v1014 = vmax.f32 %v886, %v972
        %v1015 = vmax.f32 %v887, %v975
        %v1016 = vmax.f32 %v888, %v978
        %v1017 = vmax.f32 %v889, %v981
        %v1018 = vmax.f32 %v890, %v984
        %v1019 = vmax.f32 %v891, %v987
        %v1020 = vsub.f32 %v860, %v988
        %v1021 = vsub.f32 %v861, %v989
        %v1022 = vsub.f32 %v862, %v990
        %v1023 = vsub.f32 %v863, %v991
        %v1024 = vsub.f32 %v864, %v992
        %v1025 = vsub.f32 %v865, %v993
        %v1026 = vsub.f32 %v866, %v994
        %v1027 = vsub.f32 %v867, %v995
        %v1028 = vsub.f32 %v868, %v996
        %v1029 = vsub.f32 %v869, %v997
        %v1030 = vsub.f32 %v870, %v998
        %v1031 = vsub.f32 %v871, %v999
        %v1032 = vsub.f32 %v872, %v1000
        %v1033 = vsub.f32 %v873, %v1001
        %v1034 = vsub.f32 %v874, %v1002
        %v1035 = vsub.f32 %v875, %v1003
        %v1036 = vsub.f32 %v876, %v1004
        %v1037 = vsub.f32 %v877, %v1005
        %v1038 = vsub.f32 %v878, %v1006
        %v1039 = vsub.f32 %v879, %v1007
        %v1040 = vsub.f32 %v880, %v1008
        %v1041 = vsub.f32 %v881, %v1009
        %v1042 = vsub.f32 %v882, %v1010
        %v1043 = vsub.f32 %v883, %v1011
        %v1044 = vsub.f32 %v884, %v1012
        %v1045 = vsub.f32 %v885, %v1013
        %v1046 = vsub.f32 %v886, %v1014
        %v1047 = vsub.f32 %v887, %v1015
        %v1048 = vsub.f32 %v888, %v1016
        %v1049 = vsub.f32 %v889, %v1017
        %v1050 = vsub.f32 %v890, %v1018
        %v1051 = vsub.f32 %v891, %v1019
        %v1052 = vmul.f32 %v1020, 1.442695
        %v1053 = vpow.pop %v1052
        %v1054 = vmul.f32 %v1021, 1.442695
        %v1055 = vpow.pop %v1054
        %v1056 = vmul.f32 %v1022, 1.442695
        %v1057 = vpow.pop %v1056
        %v1058 = vmul.f32 %v1023, 1.442695
        %v1059 = vpow.pop %v1058
        %v1060 = vmul.f32 %v1024, 1.442695
        %v1061 = vpow.pop %v1060
        %v1062 = vmul.f32 %v1025, 1.442695
        %v1063 = vpow.pop %v1062
        %v1064 = vmul.f32 %v1026, 1.442695
        %v1065 = vpow.pop %v1064
        %v1066 = vmul.f32 %v1027, 1.442695
        %v1067 = vpow.pop %v1066
        %v1068 = vmul.f32 %v1028, 1.442695
        %v1069 = vpow.pop %v1068
        %v1070 = vmul.f32 %v1029, 1.442695
        %v1071 = vpow.pop %v1070
        %v1072 = vmul.f32 %v1030, 1.442695
        %v1073 = vpow.pop %v1072
        %v1074 = vmul.f32 %v1031, 1.442695
        %v1075 = vpow.pop %v1074
        %v1076 = vmul.f32 %v1032, 1.442695
        %v1077 = vpow.pop %v1076
        %v1078 = vmul.f32 %v1033, 1.442695
        %v1079 = vpow.pop %v1078
        %v1080 = vmul.f32 %v1034, 1.442695
        %v1081 = vpow.pop %v1080
        %v1082 = vmul.f32 %v1035, 1.442695
        %v1083 = vpow.pop %v1082
        %v1084 = vmul.f32 %v1036, 1.442695
        %v1085 = vpow.pop %v1084
        %v1086 = vmul.f32 %v1037, 1.442695
        %v1087 = vpow.pop %v1086
        %v1088 = vmul.f32 %v1038, 1.442695
        %v1089 = vpow.pop %v1088
        %v1090 = vmul.f32 %v1039, 1.442695
        %v1091 = vpow.pop %v1090
        %v1092 = vmul.f32 %v1040, 1.442695
        %v1093 = vpow.pop %v1092
        %v1094 = vmul.f32 %v1041, 1.442695
        %v1095 = vpow.pop %v1094
        %v1096 = vmul.f32 %v1042, 1.442695
        %v1097 = vpow.pop %v1096
        %v1098 = vmul.f32 %v1043, 1.442695
        %v1099 = vpow.pop %v1098
        %v1100 = vmul.f32 %v1044, 1.442695
        %v1101 = vpow.pop %v1100
        %v1102 = vmul.f32 %v1045, 1.442695
        %v1103 = vpow.pop %v1102
        %v1104 = vmul.f32 %v1046, 1.442695
        %v1105 = vpow.pop %v1104
        %v1106 = vmul.f32 %v1047, 1.442695
        %v1107 = vpow.pop %v1106
        %v1108 = vmul.f32 %v1048, 1.442695
        %v1109 = vpow.pop %v1108
        %v1110 = vmul.f32 %v1049, 1.442695
        %v1111 = vpow.pop %v1110
        %v1112 = vmul.f32 %v1050, 1.442695
        %v1113 = vpow.pop %v1112
        %v1114 = vmul.f32 %v1051, 1.442695
        %v1115 = vpow.pop %v1114
        %1117 = vset.pattern.permute.xlu0 0
        %1118 = vperm.xlu0 %1117, %v988
        %v1119 = vpop.permute.xlu0 %1118
        %1122 = vset.pattern.permute.xlu0 0
        %1123 = vperm.xlu0 %1122, %v989
        %v1124 = vpop.permute.xlu0 %1123
        %1127 = vset.pattern.permute.xlu0 0
        %1128 = vperm.xlu0 %1127, %v990
        %v1129 = vpop.permute.xlu0 %1128
        %1132 = vset.pattern.permute.xlu0 0
        %1133 = vperm.xlu0 %1132, %v991
        %v1134 = vpop.permute.xlu0 %1133
        %1137 = vset.pattern.permute.xlu0 0
        %1138 = vperm.xlu0 %1137, %v992
        %v1139 = vpop.permute.xlu0 %1138
        %1142 = vset.pattern.permute.xlu0 0
        %1143 = vperm.xlu0 %1142, %v993
        %v1144 = vpop.permute.xlu0 %1143
        %1147 = vset.pattern.permute.xlu0 0
        %1148 = vperm.xlu0 %1147, %v994
        %v1149 = vpop.permute.xlu0 %1148
        %1152 = vset.pattern.permute.xlu0 0
        %1153 = vperm.xlu0 %1152, %v995
        %v1154 = vpop.permute.xlu0 %1153
        %1157 = vset.pattern.permute.xlu0 0
        %1158 = vperm.xlu0 %1157, %v996
        %v1159 = vpop.permute.xlu0 %1158
        %1162 = vset.pattern.permute.xlu0 0
        %1163 = vperm.xlu0 %1162, %v997
        %v1164 = vpop.permute.xlu0 %1163
        %1167 = vset.pattern.permute.xlu0 0
        %1168 = vperm.xlu0 %1167, %v998
        %v1169 = vpop.permute.xlu0 %1168
        %1172 = vset.pattern.permute.xlu0 0
        %1173 = vperm.xlu0 %1172, %v999
        %v1174 = vpop.permute.xlu0 %1173
        %1177 = vset.pattern.permute.xlu0 0
        %1178 = vperm.xlu0 %1177, %v1000
        %v1179 = vpop.permute.xlu0 %1178
        %1182 = vset.pattern.permute.xlu0 0
        %1183 = vperm.xlu0 %1182, %v1001
        %v1184 = vpop.permute.xlu0 %1183
        %1187 = vset.pattern.permute.xlu0 0
        %1188 = vperm.xlu0 %1187, %v1002
        %v1189 = vpop.permute.xlu0 %1188
        %1192 = vset.pattern.permute.xlu0 0
        %1193 = vperm.xlu0 %1192, %v1003
        %v1194 = vpop.permute.xlu0 %1193
        %1197 = vset.pattern.permute.xlu0 0
        %1198 = vperm.xlu0 %1197, %v1004
        %v1199 = vpop.permute.xlu0 %1198
        %1202 = vset.pattern.permute.xlu0 0
        %1203 = vperm.xlu0 %1202, %v1005
        %v1204 = vpop.permute.xlu0 %1203
        %1207 = vset.pattern.permute.xlu0 0
        %1208 = vperm.xlu0 %1207, %v1006
        %v1209 = vpop.permute.xlu0 %1208
        %1212 = vset.pattern.permute.xlu0 0
        %1213 = vperm.xlu0 %1212, %v1007
        %v1214 = vpop.permute.xlu0 %1213
        %1217 = vset.pattern.permute.xlu0 0
        %1218 = vperm.xlu0 %1217, %v1008
        %v1219 = vpop.permute.xlu0 %1218
        %1222 = vset.pattern.permute.xlu0 0
        %1223 = vperm.xlu0 %1222, %v1009
        %v1224 = vpop.permute.xlu0 %1223
        %1227 = vset.pattern.permute.xlu0 0
        %1228 = vperm.xlu0 %1227, %v1010
        %v1229 = vpop.permute.xlu0 %1228
        %1232 = vset.pattern.permute.xlu0 0
        %1233 = vperm.xlu0 %1232, %v1011
        %v1234 = vpop.permute.xlu0 %1233
        %1237 = vset.pattern.permute.xlu0 0
        %1238 = vperm.xlu0 %1237, %v1012
        %v1239 = vpop.permute.xlu0 %1238
        %1242 = vset.pattern.permute.xlu0 0
        %1243 = vperm.xlu0 %1242, %v1013
        %v1244 = vpop.permute.xlu0 %1243
        %1247 = vset.pattern.permute.xlu0 0
        %1248 = vperm.xlu0 %1247, %v1014
        %v1249 = vpop.permute.xlu0 %1248
        %1252 = vset.pattern.permute.xlu0 0
        %1253 = vperm.xlu0 %1252, %v1015
        %v1254 = vpop.permute.xlu0 %1253
        %1257 = vset.pattern.permute.xlu0 0
        %1258 = vperm.xlu0 %1257, %v1016
        %v1259 = vpop.permute.xlu0 %1258
        %1262 = vset.pattern.permute.xlu0 0
        %1263 = vperm.xlu0 %1262, %v1017
        %v1264 = vpop.permute.xlu0 %1263
        %1267 = vset.pattern.permute.xlu0 0
        %1268 = vperm.xlu0 %1267, %v1018
        %v1269 = vpop.permute.xlu0 %1268
        %1272 = vset.pattern.permute.xlu0 0
        %1273 = vperm.xlu0 %1272, %v1019
        %v1274 = vpop.permute.xlu0 %1273
        %v1276 = vsub.f32 %v692, %v1119
        %v1277 = vsub.f32 %v781, %v1119
        %v1278 = vsub.f32 %v694, %v1124
        %v1279 = vsub.f32 %v783, %v1124
        %v1280 = vsub.f32 %v697, %v1129
        %v1281 = vsub.f32 %v786, %v1129
        %v1282 = vsub.f32 %v699, %v1134
        %v1283 = vsub.f32 %v788, %v1134
        %v1284 = vsub.f32 %v702, %v1139
        %v1285 = vsub.f32 %v791, %v1139
        %v1286 = vsub.f32 %v704, %v1144
        %v1287 = vsub.f32 %v793, %v1144
        %v1288 = vsub.f32 %v707, %v1149
        %v1289 = vsub.f32 %v796, %v1149
        %v1290 = vsub.f32 %v709, %v1154
        %v1291 = vsub.f32 %v798, %v1154
        %v1292 = vsub.f32 %v712, %v1159
        %v1293 = vsub.f32 %v801, %v1159
        %v1294 = vsub.f32 %v714, %v1164
        %v1295 = vsub.f32 %v803, %v1164
        %v1296 = vsub.f32 %v717, %v1169
        %v1297 = vsub.f32 %v806, %v1169
        %v1298 = vsub.f32 %v719, %v1174
        %v1299 = vsub.f32 %v808, %v1174
        %v1300 = vsub.f32 %v722, %v1179
        %v1301 = vsub.f32 %v811, %v1179
        %v1302 = vsub.f32 %v724, %v1184
        %v1303 = vsub.f32 %v813, %v1184
        %v1304 = vsub.f32 %v727, %v1189
        %v1305 = vsub.f32 %v816, %v1189
        %v1306 = vsub.f32 %v729, %v1194
        %v1307 = vsub.f32 %v818, %v1194
        %v1308 = vsub.f32 %v732, %v1199
        %v1309 = vsub.f32 %v821, %v1199
        %v1310 = vsub.f32 %v734, %v1204
        %v1311 = vsub.f32 %v823, %v1204
        %v1312 = vsub.f32 %v737, %v1209
        %v1313 = vsub.f32 %v826, %v1209
        %v1314 = vsub.f32 %v739, %v1214
        %v1315 = vsub.f32 %v828, %v1214
        %v1316 = vsub.f32 %v742, %v1219
        %v1317 = vsub.f32 %v831, %v1219
        %v1318 = vsub.f32 %v744, %v1224
        %v1319 = vsub.f32 %v833, %v1224
        %v1320 = vsub.f32 %v747, %v1229
        %v1321 = vsub.f32 %v836, %v1229
        %v1322 = vsub.f32 %v749, %v1234
        %v1323 = vsub.f32 %v838, %v1234
        %v1324 = vsub.f32 %v752, %v1239
        %v1325 = vsub.f32 %v841, %v1239
        %v1326 = vsub.f32 %v754, %v1244
        %v1327 = vsub.f32 %v843, %v1244
        %v1328 = vsub.f32 %v757, %v1249
        %v1329 = vsub.f32 %v846, %v1249
        %v1330 = vsub.f32 %v759, %v1254
        %v1331 = vsub.f32 %v848, %v1254
        %v1332 = vsub.f32 %v762, %v1259
        %v1333 = vsub.f32 %v851, %v1259
        %v1334 = vsub.f32 %v764, %v1264
        %v1335 = vsub.f32 %v853, %v1264
        %v1336 = vsub.f32 %v767, %v1269
        %v1337 = vsub.f32 %v856, %v1269
        %v1338 = vsub.f32 %v769, %v1274
        %v1339 = vsub.f32 %v858, %v1274
        %v1340 = vmul.f32 %v1276, 1.442695
        %v1341 = vpow.pop %v1340
        %v1342 = vmul.f32 %v1277, 1.442695
        %v1343 = vpow.pop %v1342
        %v1344 = vmul.f32 %v1278, 1.442695
        %v1345 = vpow.pop %v1344
        %v1346 = vmul.f32 %v1279, 1.442695
        %v1347 = vpow.pop %v1346
        %v1348 = vmul.f32 %v1280, 1.442695
        %v1349 = vpow.pop %v1348
        %v1350 = vmul.f32 %v1281, 1.442695
        %v1351 = vpow.pop %v1350
        %v1352 = vmul.f32 %v1282, 1.442695
        %v1353 = vpow.pop %v1352
        %v1354 = vmul.f32 %v1283, 1.442695
        %v1355 = vpow.pop %v1354
        %v1356 = vmul.f32 %v1284, 1.442695
        %v1357 = vpow.pop %v1356
        %v1358 = vmul.f32 %v1285, 1.442695
        %v1359 = vpow.pop %v1358
        %v1360 = vmul.f32 %v1286, 1.442695
        %v1361 = vpow.pop %v1360
        %v1362 = vmul.f32 %v1287, 1.442695
        %v1363 = vpow.pop %v1362
        %v1364 = vmul.f32 %v1288, 1.442695
        %v1365 = vpow.pop %v1364
        %v1366 = vmul.f32 %v1289, 1.442695
        %v1367 = vpow.pop %v1366
        %v1368 = vmul.f32 %v1290, 1.442695
        %v1369 = vpow.pop %v1368
        %v1370 = vmul.f32 %v1291, 1.442695
        %v1371 = vpow.pop %v1370
        %v1372 = vmul.f32 %v1292, 1.442695
        %v1373 = vpow.pop %v1372
        %v1374 = vmul.f32 %v1293, 1.442695
        %v1375 = vpow.pop %v1374
        %v1376 = vmul.f32 %v1294, 1.442695
        %v1377 = vpow.pop %v1376
        %v1378 = vmul.f32 %v1295, 1.442695
        %v1379 = vpow.pop %v1378
        %v1380 = vmul.f32 %v1296, 1.442695
        %v1381 = vpow.pop %v1380
        %v1382 = vmul.f32 %v1297, 1.442695
        %v1383 = vpow.pop %v1382
        %v1384 = vmul.f32 %v1298, 1.442695
        %v1385 = vpow.pop %v1384
        %v1386 = vmul.f32 %v1299, 1.442695
        %v1387 = vpow.pop %v1386
        %v1388 = vmul.f32 %v1300, 1.442695
        %v1389 = vpow.pop %v1388
        %v1390 = vmul.f32 %v1301, 1.442695
        %v1391 = vpow.pop %v1390
        %v1392 = vmul.f32 %v1302, 1.442695
        %v1393 = vpow.pop %v1392
        %v1394 = vmul.f32 %v1303, 1.442695
        %v1395 = vpow.pop %v1394
        %v1396 = vmul.f32 %v1304, 1.442695
        %v1397 = vpow.pop %v1396
        %v1398 = vmul.f32 %v1305, 1.442695
        %v1399 = vpow.pop %v1398
        %v1400 = vmul.f32 %v1306, 1.442695
        %v1401 = vpow.pop %v1400
        %v1402 = vmul.f32 %v1307, 1.442695
        %v1403 = vpow.pop %v1402
        %v1404 = vmul.f32 %v1308, 1.442695
        %v1405 = vpow.pop %v1404
        %v1406 = vmul.f32 %v1309, 1.442695
        %v1407 = vpow.pop %v1406
        %v1408 = vmul.f32 %v1310, 1.442695
        %v1409 = vpow.pop %v1408
        %v1410 = vmul.f32 %v1311, 1.442695
        %v1411 = vpow.pop %v1410
        %v1412 = vmul.f32 %v1312, 1.442695
        %v1413 = vpow.pop %v1412
        %v1414 = vmul.f32 %v1313, 1.442695
        %v1415 = vpow.pop %v1414
        %v1416 = vmul.f32 %v1314, 1.442695
        %v1417 = vpow.pop %v1416
        %v1418 = vmul.f32 %v1315, 1.442695
        %v1419 = vpow.pop %v1418
        %v1420 = vmul.f32 %v1316, 1.442695
        %v1421 = vpow.pop %v1420
        %v1422 = vmul.f32 %v1317, 1.442695
        %v1423 = vpow.pop %v1422
        %v1424 = vmul.f32 %v1318, 1.442695
        %v1425 = vpow.pop %v1424
        %v1426 = vmul.f32 %v1319, 1.442695
        %v1427 = vpow.pop %v1426
        %v1428 = vmul.f32 %v1320, 1.442695
        %v1429 = vpow.pop %v1428
        %v1430 = vmul.f32 %v1321, 1.442695
        %v1431 = vpow.pop %v1430
        %v1432 = vmul.f32 %v1322, 1.442695
        %v1433 = vpow.pop %v1432
        %v1434 = vmul.f32 %v1323, 1.442695
        %v1435 = vpow.pop %v1434
        %v1436 = vmul.f32 %v1324, 1.442695
        %v1437 = vpow.pop %v1436
        %v1438 = vmul.f32 %v1325, 1.442695
        %v1439 = vpow.pop %v1438
        %v1440 = vmul.f32 %v1326, 1.442695
        %v1441 = vpow.pop %v1440
        %v1442 = vmul.f32 %v1327, 1.442695
        %v1443 = vpow.pop %v1442
        %v1444 = vmul.f32 %v1328, 1.442695
        %v1445 = vpow.pop %v1444
        %v1446 = vmul.f32 %v1329, 1.442695
        %v1447 = vpow.pop %v1446
        %v1448 = vmul.f32 %v1330, 1.442695
        %v1449 = vpow.pop %v1448
        %v1450 = vmul.f32 %v1331, 1.442695
        %v1451 = vpow.pop %v1450
        %v1452 = vmul.f32 %v1332, 1.442695
        %v1453 = vpow.pop %v1452
        %v1454 = vmul.f32 %v1333, 1.442695
        %v1455 = vpow.pop %v1454
        %v1456 = vmul.f32 %v1334, 1.442695
        %v1457 = vpow.pop %v1456
        %v1458 = vmul.f32 %v1335, 1.442695
        %v1459 = vpow.pop %v1458
        %v1460 = vmul.f32 %v1336, 1.442695
        %v1461 = vpow.pop %v1460
        %v1462 = vmul.f32 %v1337, 1.442695
        %v1463 = vpow.pop %v1462
        %v1464 = vmul.f32 %v1338, 1.442695
        %v1465 = vpow.pop %v1464
        %v1466 = vmul.f32 %v1339, 1.442695
        %v1467 = vpow.pop %v1466
        %v1468 = vld [vmem:[#allocation3] sm:$0xff]
        %v1469 = vld [vmem:[#allocation3 + $0x8] sm:$0xff]
        %v1470 = vld [vmem:[#allocation3 + $0x10] sm:$0xff]
        %v1471 = vld [vmem:[#allocation3 + $0x18] sm:$0xff]
        %v1472 = vld [vmem:[#allocation3 + $0x20] sm:$0xff]
        %v1473 = vld [vmem:[#allocation3 + $0x28] sm:$0xff]
        %v1474 = vld [vmem:[#allocation3 + $0x30] sm:$0xff]
        %v1475 = vld [vmem:[#allocation3 + $0x38] sm:$0xff]
        %v1476 = vld [vmem:[#allocation3 + $0x40] sm:$0xff]
        %v1477 = vld [vmem:[#allocation3 + $0x48] sm:$0xff]
        %v1478 = vld [vmem:[#allocation3 + $0x50] sm:$0xff]
        %v1479 = vld [vmem:[#allocation3 + $0x58] sm:$0xff]
        %v1480 = vld [vmem:[#allocation3 + $0x60] sm:$0xff]
        %v1481 = vld [vmem:[#allocation3 + $0x68] sm:$0xff]
        %v1482 = vld [vmem:[#allocation3 + $0x70] sm:$0xff]
        %v1483 = vld [vmem:[#allocation3 + $0x78] sm:$0xff]
        %v1484 = vld [vmem:[#allocation3 + $0x80] sm:$0xff]
        %v1485 = vld [vmem:[#allocation3 + $0x88] sm:$0xff]
        %v1486 = vld [vmem:[#allocation3 + $0x90] sm:$0xff]
        %v1487 = vld [vmem:[#allocation3 + $0x98] sm:$0xff]
        %v1488 = vld [vmem:[#allocation3 + $0xa0] sm:$0xff]
        %v1489 = vld [vmem:[#allocation3 + $0xa8] sm:$0xff]
        %v1490 = vld [vmem:[#allocation3 + $0xb0] sm:$0xff]
        %v1491 = vld [vmem:[#allocation3 + $0xb8] sm:$0xff]
        %v1492 = vld [vmem:[#allocation3 + $0xc0] sm:$0xff]
        %v1493 = vld [vmem:[#allocation3 + $0xc8] sm:$0xff]
        %v1494 = vld [vmem:[#allocation3 + $0xd0] sm:$0xff]
        %v1495 = vld [vmem:[#allocation3 + $0xd8] sm:$0xff]
        %v1496 = vld [vmem:[#allocation3 + $0xe0] sm:$0xff]
        %v1497 = vld [vmem:[#allocation3 + $0xe8] sm:$0xff]
        %v1498 = vld [vmem:[#allocation3 + $0xf0] sm:$0xff]
        %v1499 = vld [vmem:[#allocation3 + $0xf8] sm:$0xff]
        %v1500 = vmul.f32 %v1053, %v1468
        %v1501 = vmul.f32 %v1055, %v1469
        %v1502 = vmul.f32 %v1057, %v1470
        %v1503 = vmul.f32 %v1059, %v1471
        %v1504 = vmul.f32 %v1061, %v1472
        %v1505 = vmul.f32 %v1063, %v1473
        %v1506 = vmul.f32 %v1065, %v1474
        %v1507 = vmul.f32 %v1067, %v1475
        %v1508 = vmul.f32 %v1069, %v1476
        %v1509 = vmul.f32 %v1071, %v1477
        %v1510 = vmul.f32 %v1073, %v1478
        %v1511 = vmul.f32 %v1075, %v1479
        %v1512 = vmul.f32 %v1077, %v1480
        %v1513 = vmul.f32 %v1079, %v1481
        %v1514 = vmul.f32 %v1081, %v1482
        %v1515 = vmul.f32 %v1083, %v1483
        %v1516 = vmul.f32 %v1085, %v1484
        %v1517 = vmul.f32 %v1087, %v1485
        %v1518 = vmul.f32 %v1089, %v1486
        %v1519 = vmul.f32 %v1091, %v1487
        %v1520 = vmul.f32 %v1093, %v1488
        %v1521 = vmul.f32 %v1095, %v1489
        %v1522 = vmul.f32 %v1097, %v1490
        %v1523 = vmul.f32 %v1099, %v1491
        %v1524 = vmul.f32 %v1101, %v1492
        %v1525 = vmul.f32 %v1103, %v1493
        %v1526 = vmul.f32 %v1105, %v1494
        %v1527 = vmul.f32 %v1107, %v1495
        %v1528 = vmul.f32 %v1109, %v1496
        %v1529 = vmul.f32 %v1111, %v1497
        %v1530 = vmul.f32 %v1113, %v1498
        %v1531 = vmul.f32 %v1115, %v1499
        %v1532 = vadd.f32 %v1341, %v1343
        %1533 = vadd.xlane.f32.xlu0 %v1532
        %v1534 = vpop.xlane.xlu0 %1533
        %v1535 = vadd.f32 %v1345, %v1347
        %1536 = vadd.xlane.f32.xlu0 %v1535
        %v1537 = vpop.xlane.xlu0 %1536
        %v1538 = vadd.f32 %v1349, %v1351
        %1539 = vadd.xlane.f32.xlu0 %v1538
        %v1540 = vpop.xlane.xlu0 %1539
        %v1541 = vadd.f32 %v1353, %v1355
        %1542 = vadd.xlane.f32.xlu0 %v1541
        %v1543 = vpop.xlane.xlu0 %1542
        %v1544 = vadd.f32 %v1357, %v1359
        %1545 = vadd.xlane.f32.xlu0 %v1544
        %v1546 = vpop.xlane.xlu0 %1545
        %v1547 = vadd.f32 %v1361, %v1363
        %1548 = vadd.xlane.f32.xlu0 %v1547
        %v1549 = vpop.xlane.xlu0 %1548
        %v1550 = vadd.f32 %v1365, %v1367
        %1551 = vadd.xlane.f32.xlu0 %v1550
        %v1552 = vpop.xlane.xlu0 %1551
        %v1553 = vadd.f32 %v1369, %v1371
        %1554 = vadd.xlane.f32.xlu0 %v1553
        %v1555 = vpop.xlane.xlu0 %1554
        %v1556 = vadd.f32 %v1373, %v1375
        %1557 = vadd.xlane.f32.xlu0 %v1556
        %v1558 = vpop.xlane.xlu0 %1557
        %v1559 = vadd.f32 %v1377, %v1379
        %1560 = vadd.xlane.f32.xlu0 %v1559
        %v1561 = vpop.xlane.xlu0 %1560
        %v1562 = vadd.f32 %v1381, %v1383
        %1563 = vadd.xlane.f32.xlu0 %v1562
        %v1564 = vpop.xlane.xlu0 %1563
        %v1565 = vadd.f32 %v1385, %v1387
        %1566 = vadd.xlane.f32.xlu0 %v1565
        %v1567 = vpop.xlane.xlu0 %1566
        %v1568 = vadd.f32 %v1389, %v1391
        %1569 = vadd.xlane.f32.xlu0 %v1568
        %v1570 = vpop.xlane.xlu0 %1569
        %v1571 = vadd.f32 %v1393, %v1395
        %1572 = vadd.xlane.f32.xlu0 %v1571
        %v1573 = vpop.xlane.xlu0 %1572
        %v1574 = vadd.f32 %v1397, %v1399
        %1575 = vadd.xlane.f32.xlu0 %v1574
        %v1576 = vpop.xlane.xlu0 %1575
        %v1577 = vadd.f32 %v1401, %v1403
        %1578 = vadd.xlane.f32.xlu0 %v1577
        %v1579 = vpop.xlane.xlu0 %1578
        %v1580 = vadd.f32 %v1405, %v1407
        %1581 = vadd.xlane.f32.xlu0 %v1580
        %v1582 = vpop.xlane.xlu0 %1581
        %v1583 = vadd.f32 %v1409, %v1411
        %1584 = vadd.xlane.f32.xlu0 %v1583
        %v1585 = vpop.xlane.xlu0 %1584
        %v1586 = vadd.f32 %v1413, %v1415
        %1587 = vadd.xlane.f32.xlu0 %v1586
        %v1588 = vpop.xlane.xlu0 %1587
        %v1589 = vadd.f32 %v1417, %v1419
        %1590 = vadd.xlane.f32.xlu0 %v1589
        %v1591 = vpop.xlane.xlu0 %1590
        %v1592 = vadd.f32 %v1421, %v1423
        %1593 = vadd.xlane.f32.xlu0 %v1592
        %v1594 = vpop.xlane.xlu0 %1593
        %v1595 = vadd.f32 %v1425, %v1427
        %1596 = vadd.xlane.f32.xlu0 %v1595
        %v1597 = vpop.xlane.xlu0 %1596
        %v1598 = vadd.f32 %v1429, %v1431
        %1599 = vadd.xlane.f32.xlu0 %v1598
        %v1600 = vpop.xlane.xlu0 %1599
        %v1601 = vadd.f32 %v1433, %v1435
        %1602 = vadd.xlane.f32.xlu0 %v1601
        %v1603 = vpop.xlane.xlu0 %1602
        %v1604 = vadd.f32 %v1437, %v1439
        %1605 = vadd.xlane.f32.xlu0 %v1604
        %v1606 = vpop.xlane.xlu0 %1605
        %v1607 = vadd.f32 %v1441, %v1443
        %1608 = vadd.xlane.f32.xlu0 %v1607
        %v1609 = vpop.xlane.xlu0 %1608
        %v1610 = vadd.f32 %v1445, %v1447
        %1611 = vadd.xlane.f32.xlu0 %v1610
        %v1612 = vpop.xlane.xlu0 %1611
        %v1613 = vadd.f32 %v1449, %v1451
        %1614 = vadd.xlane.f32.xlu0 %v1613
        %v1615 = vpop.xlane.xlu0 %1614
        %v1616 = vadd.f32 %v1453, %v1455
        %1617 = vadd.xlane.f32.xlu0 %v1616
        %v1618 = vpop.xlane.xlu0 %1617
        %v1619 = vadd.f32 %v1457, %v1459
        %1620 = vadd.xlane.f32.xlu0 %v1619
        %v1621 = vpop.xlane.xlu0 %1620
        %v1622 = vadd.f32 %v1461, %v1463
        %1623 = vadd.xlane.f32.xlu0 %v1622
        %v1624 = vpop.xlane.xlu0 %1623
        %v1625 = vadd.f32 %v1465, %v1467
        %1626 = vadd.xlane.f32.xlu0 %v1625
        %v1627 = vpop.xlane.xlu0 %1626
        %v1628 = vadd.f32 %v1500, %v1534
        %v1629 = vadd.f32 %v1501, %v1537
        %v1630 = vadd.f32 %v1502, %v1540
        %v1631 = vadd.f32 %v1503, %v1543
        %v1632 = vadd.f32 %v1504, %v1546
        %v1633 = vadd.f32 %v1505, %v1549
        %v1634 = vadd.f32 %v1506, %v1552
        %v1635 = vadd.f32 %v1507, %v1555
        %v1636 = vadd.f32 %v1508, %v1558
        %v1637 = vadd.f32 %v1509, %v1561
        %v1638 = vadd.f32 %v1510, %v1564
        %v1639 = vadd.f32 %v1511, %v1567
        %v1640 = vadd.f32 %v1512, %v1570
        %v1641 = vadd.f32 %v1513, %v1573
        %v1642 = vadd.f32 %v1514, %v1576
        %v1643 = vadd.f32 %v1515, %v1579
        %v1644 = vadd.f32 %v1516, %v1582
        %v1645 = vadd.f32 %v1517, %v1585
        %v1646 = vadd.f32 %v1518, %v1588
        %v1647 = vadd.f32 %v1519, %v1591
        %v1648 = vadd.f32 %v1520, %v1594
        %v1649 = vadd.f32 %v1521, %v1597
        %v1650 = vadd.f32 %v1522, %v1600
        %v1651 = vadd.f32 %v1523, %v1603
        %v1652 = vadd.f32 %v1524, %v1606
        %v1653 = vadd.f32 %v1525, %v1609
        %v1654 = vadd.f32 %v1526, %v1612
        %v1655 = vadd.f32 %v1527, %v1615
        %v1656 = vadd.f32 %v1528, %v1618
        %v1657 = vadd.f32 %v1529, %v1621
        %v1658 = vadd.f32 %v1530, %v1624
        %v1659 = vadd.f32 %v1531, %v1627
        %vm1660 = vcmask 7168
        %1661 = vst.msk [vmem:[#allocation3] sm:$0xff] %vm1660, %v1628
        %1662 = vst.msk [vmem:[#allocation3 + $0x8] sm:$0xff] %vm1660, %v1629
        %1663 = vst.msk [vmem:[#allocation3 + $0x10] sm:$0xff] %vm1660, %v1630
        %1664 = vst.msk [vmem:[#allocation3 + $0x18] sm:$0xff] %vm1660, %v1631
        %1665 = vst.msk [vmem:[#allocation3 + $0x20] sm:$0xff] %vm1660, %v1632
        %1666 = vst.msk [vmem:[#allocation3 + $0x28] sm:$0xff] %vm1660, %v1633
        %1667 = vst.msk [vmem:[#allocation3 + $0x30] sm:$0xff] %vm1660, %v1634
        %1668 = vst.msk [vmem:[#allocation3 + $0x38] sm:$0xff] %vm1660, %v1635
        %1669 = vst.msk [vmem:[#allocation3 + $0x40] sm:$0xff] %vm1660, %v1636
        %1670 = vst.msk [vmem:[#allocation3 + $0x48] sm:$0xff] %vm1660, %v1637
        %1671 = vst.msk [vmem:[#allocation3 + $0x50] sm:$0xff] %vm1660, %v1638
        %1672 = vst.msk [vmem:[#allocation3 + $0x58] sm:$0xff] %vm1660, %v1639
        %1673 = vst.msk [vmem:[#allocation3 + $0x60] sm:$0xff] %vm1660, %v1640
        %1674 = vst.msk [vmem:[#allocation3 + $0x68] sm:$0xff] %vm1660, %v1641
        %1675 = vst.msk [vmem:[#allocation3 + $0x70] sm:$0xff] %vm1660, %v1642
        %1676 = vst.msk [vmem:[#allocation3 + $0x78] sm:$0xff] %vm1660, %v1643
        %1677 = vst.msk [vmem:[#allocation3 + $0x80] sm:$0xff] %vm1660, %v1644
        %1678 = vst.msk [vmem:[#allocation3 + $0x88] sm:$0xff] %vm1660, %v1645
        %1679 = vst.msk [vmem:[#allocation3 + $0x90] sm:$0xff] %vm1660, %v1646
        %1680 = vst.msk [vmem:[#allocation3 + $0x98] sm:$0xff] %vm1660, %v1647
        %1681 = vst.msk [vmem:[#allocation3 + $0xa0] sm:$0xff] %vm1660, %v1648
        %1682 = vst.msk [vmem:[#allocation3 + $0xa8] sm:$0xff] %vm1660, %v1649
        %1683 = vst.msk [vmem:[#allocation3 + $0xb0] sm:$0xff] %vm1660, %v1650
        %1684 = vst.msk [vmem:[#allocation3 + $0xb8] sm:$0xff] %vm1660, %v1651
        %1685 = vst.msk [vmem:[#allocation3 + $0xc0] sm:$0xff] %vm1660, %v1652
        %1686 = vst.msk [vmem:[#allocation3 + $0xc8] sm:$0xff] %vm1660, %v1653
        %1687 = vst.msk [vmem:[#allocation3 + $0xd0] sm:$0xff] %vm1660, %v1654
        %1688 = vst.msk [vmem:[#allocation3 + $0xd8] sm:$0xff] %vm1660, %v1655
        %1689 = vst.msk [vmem:[#allocation3 + $0xe0] sm:$0xff] %vm1660, %v1656
        %1690 = vst.msk [vmem:[#allocation3 + $0xe8] sm:$0xff] %vm1660, %v1657
        %1691 = vst.msk [vmem:[#allocation3 + $0xf0] sm:$0xff] %vm1660, %v1658
        %1692 = vst.msk [vmem:[#allocation3 + $0xf8] sm:$0xff] %vm1660, %v1659
        %v1693 = vld [vmem:[#allocation4] sm:$0xff]
        %v1694 = vld [vmem:[#allocation4 + $0x8] sm:$0xff]
        %v1695 = vld [vmem:[#allocation4 + $0x10] sm:$0xff]
        %v1696 = vld [vmem:[#allocation4 + $0x18] sm:$0xff]
        %v1697 = vld [vmem:[#allocation4 + $0x20] sm:$0xff]
        %v1698 = vld [vmem:[#allocation4 + $0x28] sm:$0xff]
        %v1699 = vld [vmem:[#allocation4 + $0x30] sm:$0xff]
        %v1700 = vld [vmem:[#allocation4 + $0x38] sm:$0xff]
        %v1701 = vld [vmem:[#allocation4 + $0x40] sm:$0xff]
        %v1702 = vld [vmem:[#allocation4 + $0x48] sm:$0xff]
        %v1703 = vld [vmem:[#allocation4 + $0x50] sm:$0xff]
        %v1704 = vld [vmem:[#allocation4 + $0x58] sm:$0xff]
        %v1705 = vld [vmem:[#allocation4 + $0x60] sm:$0xff]
        %v1706 = vld [vmem:[#allocation4 + $0x68] sm:$0xff]
        %v1707 = vld [vmem:[#allocation4 + $0x70] sm:$0xff]
        %v1708 = vld [vmem:[#allocation4 + $0x78] sm:$0xff]
        %v1709 = vld [vmem:[#allocation4 + $0x80] sm:$0xff]
        %v1710 = vld [vmem:[#allocation4 + $0x88] sm:$0xff]
        %v1711 = vld [vmem:[#allocation4 + $0x90] sm:$0xff]
        %v1712 = vld [vmem:[#allocation4 + $0x98] sm:$0xff]
        %v1713 = vld [vmem:[#allocation4 + $0xa0] sm:$0xff]
        %v1714 = vld [vmem:[#allocation4 + $0xa8] sm:$0xff]
        %v1715 = vld [vmem:[#allocation4 + $0xb0] sm:$0xff]
        %v1716 = vld [vmem:[#allocation4 + $0xb8] sm:$0xff]
        %v1717 = vld [vmem:[#allocation4 + $0xc0] sm:$0xff]
        %v1718 = vld [vmem:[#allocation4 + $0xc8] sm:$0xff]
        %v1719 = vld [vmem:[#allocation4 + $0xd0] sm:$0xff]
        %v1720 = vld [vmem:[#allocation4 + $0xd8] sm:$0xff]
        %v1721 = vld [vmem:[#allocation4 + $0xe0] sm:$0xff]
        %v1722 = vld [vmem:[#allocation4 + $0xe8] sm:$0xff]
        %v1723 = vld [vmem:[#allocation4 + $0xf0] sm:$0xff]
        %v1724 = vld [vmem:[#allocation4 + $0xf8] sm:$0xff]
        %1726 = vset.pattern.permute.xlu0 0
        %1727 = vperm.xlu0 %1726, %v1053
        %v1728 = vpop.permute.xlu0 %1727
        %1731 = vset.pattern.permute.xlu0 0
        %1732 = vperm.xlu0 %1731, %v1055
        %v1733 = vpop.permute.xlu0 %1732
        %1736 = vset.pattern.permute.xlu0 0
        %1737 = vperm.xlu0 %1736, %v1057
        %v1738 = vpop.permute.xlu0 %1737
        %1741 = vset.pattern.permute.xlu0 0
        %1742 = vperm.xlu0 %1741, %v1059
        %v1743 = vpop.permute.xlu0 %1742
        %1746 = vset.pattern.permute.xlu0 0
        %1747 = vperm.xlu0 %1746, %v1061
        %v1748 = vpop.permute.xlu0 %1747
        %1751 = vset.pattern.permute.xlu0 0
        %1752 = vperm.xlu0 %1751, %v1063
        %v1753 = vpop.permute.xlu0 %1752
        %1756 = vset.pattern.permute.xlu0 0
        %1757 = vperm.xlu0 %1756, %v1065
        %v1758 = vpop.permute.xlu0 %1757
        %1761 = vset.pattern.permute.xlu0 0
        %1762 = vperm.xlu0 %1761, %v1067
        %v1763 = vpop.permute.xlu0 %1762
        %1766 = vset.pattern.permute.xlu0 0
        %1767 = vperm.xlu0 %1766, %v1069
        %v1768 = vpop.permute.xlu0 %1767
        %1771 = vset.pattern.permute.xlu0 0
        %1772 = vperm.xlu0 %1771, %v1071
        %v1773 = vpop.permute.xlu0 %1772
        %1776 = vset.pattern.permute.xlu0 0
        %1777 = vperm.xlu0 %1776, %v1073
        %v1778 = vpop.permute.xlu0 %1777
        %1781 = vset.pattern.permute.xlu0 0
        %1782 = vperm.xlu0 %1781, %v1075
        %v1783 = vpop.permute.xlu0 %1782
        %1786 = vset.pattern.permute.xlu0 0
        %1787 = vperm.xlu0 %1786, %v1077
        %v1788 = vpop.permute.xlu0 %1787
        %1791 = vset.pattern.permute.xlu0 0
        %1792 = vperm.xlu0 %1791, %v1079
        %v1793 = vpop.permute.xlu0 %1792
        %1796 = vset.pattern.permute.xlu0 0
        %1797 = vperm.xlu0 %1796, %v1081
        %v1798 = vpop.permute.xlu0 %1797
        %1801 = vset.pattern.permute.xlu0 0
        %1802 = vperm.xlu0 %1801, %v1083
        %v1803 = vpop.permute.xlu0 %1802
        %1806 = vset.pattern.permute.xlu0 0
        %1807 = vperm.xlu0 %1806, %v1085
        %v1808 = vpop.permute.xlu0 %1807
        %1811 = vset.pattern.permute.xlu0 0
        %1812 = vperm.xlu0 %1811, %v1087
        %v1813 = vpop.permute.xlu0 %1812
        %1816 = vset.pattern.permute.xlu0 0
        %1817 = vperm.xlu0 %1816, %v1089
        %v1818 = vpop.permute.xlu0 %1817
        %1821 = vset.pattern.permute.xlu0 0
        %1822 = vperm.xlu0 %1821, %v1091
        %v1823 = vpop.permute.xlu0 %1822
        %1826 = vset.pattern.permute.xlu0 0
        %1827 = vperm.xlu0 %1826, %v1093
        %v1828 = vpop.permute.xlu0 %1827
        %1831 = vset.pattern.permute.xlu0 0
        %1832 = vperm.xlu0 %1831, %v1095
        %v1833 = vpop.permute.xlu0 %1832
        %1836 = vset.pattern.permute.xlu0 0
        %1837 = vperm.xlu0 %1836, %v1097
        %v1838 = vpop.permute.xlu0 %1837
        %1841 = vset.pattern.permute.xlu0 0
        %1842 = vperm.xlu0 %1841, %v1099
        %v1843 = vpop.permute.xlu0 %1842
        %1846 = vset.pattern.permute.xlu0 0
        %1847 = vperm.xlu0 %1846, %v1101
        %v1848 = vpop.permute.xlu0 %1847
        %1851 = vset.pattern.permute.xlu0 0
        %1852 = vperm.xlu0 %1851, %v1103
        %v1853 = vpop.permute.xlu0 %1852
        %1856 = vset.pattern.permute.xlu0 0
        %1857 = vperm.xlu0 %1856, %v1105
        %v1858 = vpop.permute.xlu0 %1857
        %1861 = vset.pattern.permute.xlu0 0
        %1862 = vperm.xlu0 %1861, %v1107
        %v1863 = vpop.permute.xlu0 %1862
        %1866 = vset.pattern.permute.xlu0 0
        %1867 = vperm.xlu0 %1866, %v1109
        %v1868 = vpop.permute.xlu0 %1867
        %1871 = vset.pattern.permute.xlu0 0
        %1872 = vperm.xlu0 %1871, %v1111
        %v1873 = vpop.permute.xlu0 %1872
        %1876 = vset.pattern.permute.xlu0 0
        %1877 = vperm.xlu0 %1876, %v1113
        %v1878 = vpop.permute.xlu0 %1877
        %1881 = vset.pattern.permute.xlu0 0
        %1882 = vperm.xlu0 %1881, %v1115
        %v1883 = vpop.permute.xlu0 %1882
        %v1885 = vmul.f32 %v1728, %v1693
        %v1886 = vmul.f32 %v1733, %v1694
        %v1887 = vmul.f32 %v1738, %v1695
        %v1888 = vmul.f32 %v1743, %v1696
        %v1889 = vmul.f32 %v1748, %v1697
        %v1890 = vmul.f32 %v1753, %v1698
        %v1891 = vmul.f32 %v1758, %v1699
        %v1892 = vmul.f32 %v1763, %v1700
        %v1893 = vmul.f32 %v1768, %v1701
        %v1894 = vmul.f32 %v1773, %v1702
        %v1895 = vmul.f32 %v1778, %v1703
        %v1896 = vmul.f32 %v1783, %v1704
        %v1897 = vmul.f32 %v1788, %v1705
        %v1898 = vmul.f32 %v1793, %v1706
        %v1899 = vmul.f32 %v1798, %v1707
        %v1900 = vmul.f32 %v1803, %v1708
        %v1901 = vmul.f32 %v1808, %v1709
        %v1902 = vmul.f32 %v1813, %v1710
        %v1903 = vmul.f32 %v1818, %v1711
        %v1904 = vmul.f32 %v1823, %v1712
        %v1905 = vmul.f32 %v1828, %v1713
        %v1906 = vmul.f32 %v1833, %v1714
        %v1907 = vmul.f32 %v1838, %v1715
        %v1908 = vmul.f32 %v1843, %v1716
        %v1909 = vmul.f32 %v1848, %v1717
        %v1910 = vmul.f32 %v1853, %v1718
        %v1911 = vmul.f32 %v1858, %v1719
        %v1912 = vmul.f32 %v1863, %v1720
        %v1913 = vmul.f32 %v1868, %v1721
        %v1914 = vmul.f32 %v1873, %v1722
        %v1915 = vmul.f32 %v1878, %v1723
        %v1916 = vmul.f32 %v1883, %v1724
        %v1917 = vpack.c.bf16 %v1345, %v1341
        %v1918 = vpack.c.bf16 %v1347, %v1343
        %v1919 = vpack.c.bf16 %v1353, %v1349
        %v1920 = vpack.c.bf16 %v1355, %v1351
        %v1921 = vpack.c.bf16 %v1361, %v1357
        %v1922 = vpack.c.bf16 %v1363, %v1359
        %v1923 = vpack.c.bf16 %v1369, %v1365
        %v1924 = vpack.c.bf16 %v1371, %v1367
        %v1925 = vpack.c.bf16 %v1377, %v1373
        %v1926 = vpack.c.bf16 %v1379, %v1375
        %v1927 = vpack.c.bf16 %v1385, %v1381
        %v1928 = vpack.c.bf16 %v1387, %v1383
        %v1929 = vpack.c.bf16 %v1393, %v1389
        %v1930 = vpack.c.bf16 %v1395, %v1391
        %v1931 = vpack.c.bf16 %v1401, %v1397
        %v1932 = vpack.c.bf16 %v1403, %v1399
        %v1933 = vpack.c.bf16 %v1409, %v1405
        %v1934 = vpack.c.bf16 %v1411, %v1407
        %v1935 = vpack.c.bf16 %v1417, %v1413
        %v1936 = vpack.c.bf16 %v1419, %v1415
        %v1937 = vpack.c.bf16 %v1425, %v1421
        %v1938 = vpack.c.bf16 %v1427, %v1423
        %v1939 = vpack.c.bf16 %v1433, %v1429
        %v1940 = vpack.c.bf16 %v1435, %v1431
        %v1941 = vpack.c.bf16 %v1441, %v1437
        %v1942 = vpack.c.bf16 %v1443, %v1439
        %v1943 = vpack.c.bf16 %v1449, %v1445
        %v1944 = vpack.c.bf16 %v1451, %v1447
        %v1945 = vpack.c.bf16 %v1457, %v1453
        %v1946 = vpack.c.bf16 %v1459, %v1455
        %v1947 = vpack.c.bf16 %v1465, %v1461
        %v1948 = vpack.c.bf16 %v1467, %v1463
        %v1981 = vunpack.c.l.b16 %v554
        %v1982 = vunpack.c.l.b16 %v555
        %v1983 = vunpack.c.l.b16 %v556
        %v1984 = vunpack.c.l.b16 %v557
        %v1985 = vunpack.c.l.b16 %v558
        %v1986 = vunpack.c.l.b16 %v559
        %v1987 = vunpack.c.l.b16 %v560
        %v1988 = vunpack.c.l.b16 %v561
        %v1989 = vunpack.c.l.b16 %v562
        %v1990 = vunpack.c.l.b16 %v563
        %v1991 = vunpack.c.l.b16 %v564
        %v1992 = vunpack.c.l.b16 %v565
        %v1993 = vunpack.c.l.b16 %v566
        %v1994 = vunpack.c.l.b16 %v567
        %v1995 = vunpack.c.l.b16 %v568
        %v1996 = vunpack.c.l.b16 %v569
        %v1997 = vunpack.c.l.b16 %v570
        %v1998 = vunpack.c.l.b16 %v571
        %v1999 = vunpack.c.l.b16 %v572
        %v2000 = vunpack.c.l.b16 %v573
        %v2001 = vunpack.c.l.b16 %v574
        %v2002 = vunpack.c.l.b16 %v575
        %v2003 = vunpack.c.l.b16 %v576
        %v2004 = vunpack.c.l.b16 %v577
        %v2005 = vunpack.c.l.b16 %v578
        %v2006 = vunpack.c.l.b16 %v579
        %v2007 = vunpack.c.l.b16 %v580
        %v2008 = vunpack.c.l.b16 %v581
        %v2009 = vunpack.c.l.b16 %v582
        %v2010 = vunpack.c.l.b16 %v583
        %v2011 = vunpack.c.l.b16 %v584
        %v2012 = vunpack.c.l.b16 %v585
        %v2013 = vpack.c.b16 %v1982, %v1981
        %v2014 = vpack.c.b16 %v1984, %v1983
        %v2015 = vpack.c.b16 %v1986, %v1985
        %v2016 = vpack.c.b16 %v1988, %v1987
        %v2017 = vpack.c.b16 %v1990, %v1989
        %v2018 = vpack.c.b16 %v1992, %v1991
        %v2019 = vpack.c.b16 %v1994, %v1993
        %v2020 = vpack.c.b16 %v1996, %v1995
        %v2021 = vpack.c.b16 %v1998, %v1997
        %v2022 = vpack.c.b16 %v2000, %v1999
        %v2023 = vpack.c.b16 %v2002, %v2001
        %v2024 = vpack.c.b16 %v2004, %v2003
        %v2025 = vpack.c.b16 %v2006, %v2005
        %v2026 = vpack.c.b16 %v2008, %v2007
        %v2027 = vpack.c.b16 %v2010, %v2009
        %v2028 = vpack.c.b16 %v2012, %v2011
        %2045 = vmatpush.bf16.msra.mxu0 %v2020
        %2046 = vmatpush.bf16.msra.mxu0 %v2019
        %2047 = vmatpush.bf16.msra.mxu0 %v2018
        %2048 = vmatpush.bf16.msra.mxu0 %v2017
        %2049 = vmatpush.bf16.msra.mxu0 %v2016
        %2050 = vmatpush.bf16.msra.mxu0 %v2015
        %2051 = vmatpush.bf16.msra.mxu0 %v2014
        %2052 = vmatpush.bf16.msra.mxu0 %v2013
        %2053 = vmatmul.bf16.gmra.mxu0 %v1917
        %v2054 = vpop.f32.mrf.mxu0
        %v2055 = vadd.f32 0.0, %v2054
        %v2056 = vpop.f32.mrf.mxu0
        %v2057 = vadd.f32 0.0, %v2056
        %2058 = vmatmul.bf16.gmra.mxu0 %v1919
        %v2059 = vpop.f32.mrf.mxu0
        %v2060 = vadd.f32 0.0, %v2059
        %v2061 = vpop.f32.mrf.mxu0
        %v2062 = vadd.f32 0.0, %v2061
        %2063 = vmatmul.bf16.gmra.mxu0 %v1921
        %v2064 = vpop.f32.mrf.mxu0
        %v2065 = vadd.f32 0.0, %v2064
        %v2066 = vpop.f32.mrf.mxu0
        %v2067 = vadd.f32 0.0, %v2066
        %2068 = vmatmul.bf16.gmra.mxu0 %v1923
        %v2069 = vpop.f32.mrf.mxu0
        %v2070 = vadd.f32 0.0, %v2069
        %v2071 = vpop.f32.mrf.mxu0
        %v2072 = vadd.f32 0.0, %v2071
        %2073 = vmatmul.bf16.gmra.mxu0 %v1925
        %v2074 = vpop.f32.mrf.mxu0
        %v2075 = vadd.f32 0.0, %v2074
        %v2076 = vpop.f32.mrf.mxu0
        %v2077 = vadd.f32 0.0, %v2076
        %2078 = vmatmul.bf16.gmra.mxu0 %v1927
        %v2079 = vpop.f32.mrf.mxu0
        %v2080 = vadd.f32 0.0, %v2079
        %v2081 = vpop.f32.mrf.mxu0
        %v2082 = vadd.f32 0.0, %v2081
        %2083 = vmatmul.bf16.gmra.mxu0 %v1929
        %v2084 = vpop.f32.mrf.mxu0
        %v2085 = vadd.f32 0.0, %v2084
        %v2086 = vpop.f32.mrf.mxu0
        %v2087 = vadd.f32 0.0, %v2086
        %2088 = vmatmul.bf16.gmra.mxu0 %v1931
        %v2089 = vpop.f32.mrf.mxu0
        %v2090 = vadd.f32 0.0, %v2089
        %v2091 = vpop.f32.mrf.mxu0
        %v2092 = vadd.f32 0.0, %v2091
        %2093 = vmatmul.bf16.gmra.mxu0 %v1933
        %v2094 = vpop.f32.mrf.mxu0
        %v2095 = vadd.f32 0.0, %v2094
        %v2096 = vpop.f32.mrf.mxu0
        %v2097 = vadd.f32 0.0, %v2096
        %2098 = vmatmul.bf16.gmra.mxu0 %v1935
        %v2099 = vpop.f32.mrf.mxu0
        %v2100 = vadd.f32 0.0, %v2099
        %v2101 = vpop.f32.mrf.mxu0
        %v2102 = vadd.f32 0.0, %v2101
        %2103 = vmatmul.bf16.gmra.mxu0 %v1937
        %v2104 = vpop.f32.mrf.mxu0
        %v2105 = vadd.f32 0.0, %v2104
        %v2106 = vpop.f32.mrf.mxu0
        %v2107 = vadd.f32 0.0, %v2106
        %2108 = vmatmul.bf16.gmra.mxu0 %v1939
        %v2109 = vpop.f32.mrf.mxu0
        %v2110 = vadd.f32 0.0, %v2109
        %v2111 = vpop.f32.mrf.mxu0
        %v2112 = vadd.f32 0.0, %v2111
        %2113 = vmatmul.bf16.gmra.mxu0 %v1941
        %v2114 = vpop.f32.mrf.mxu0
        %v2115 = vadd.f32 0.0, %v2114
        %v2116 = vpop.f32.mrf.mxu0
        %v2117 = vadd.f32 0.0, %v2116
        %2118 = vmatmul.bf16.gmra.mxu0 %v1943
        %v2119 = vpop.f32.mrf.mxu0
        %v2120 = vadd.f32 0.0, %v2119
        %v2121 = vpop.f32.mrf.mxu0
        %v2122 = vadd.f32 0.0, %v2121
        %2123 = vmatmul.bf16.gmra.mxu0 %v1945
        %v2124 = vpop.f32.mrf.mxu0
        %v2125 = vadd.f32 0.0, %v2124
        %v2126 = vpop.f32.mrf.mxu0
        %v2127 = vadd.f32 0.0, %v2126
        %2128 = vmatmul.bf16.gmra.mxu0 %v1947
        %v2129 = vpop.f32.mrf.mxu0
        %v2130 = vadd.f32 0.0, %v2129
        %v2131 = vpop.f32.mrf.mxu0
        %v2132 = vadd.f32 0.0, %v2131
        %2133 = vdwg.mxu0
        %2134 = vmatpush.bf16.msra.mxu0 %v2028
        %2135 = vmatpush.bf16.msra.mxu0 %v2027
        %2136 = vmatpush.bf16.msra.mxu0 %v2026
        %2137 = vmatpush.bf16.msra.mxu0 %v2025
        %2138 = vmatpush.bf16.msra.mxu0 %v2024
        %2139 = vmatpush.bf16.msra.mxu0 %v2023
        %2140 = vmatpush.bf16.msra.mxu0 %v2022
        %2141 = vmatpush.bf16.msra.mxu0 %v2021
        %2142 = vmatmul.bf16.gmra.mxu0 %v1918
        %v2143 = vpop.f32.mrf.mxu0
        %v2144 = vadd.f32 %v2055, %v2143
        %v2145 = vpop.f32.mrf.mxu0
        %v2146 = vadd.f32 %v2057, %v2145
        %2147 = vmatmul.bf16.gmra.mxu0 %v1920
        %v2148 = vpop.f32.mrf.mxu0
        %v2149 = vadd.f32 %v2060, %v2148
        %v2150 = vpop.f32.mrf.mxu0
        %v2151 = vadd.f32 %v2062, %v2150
        %2152 = vmatmul.bf16.gmra.mxu0 %v1922
        %v2153 = vpop.f32.mrf.mxu0
        %v2154 = vadd.f32 %v2065, %v2153
        %v2155 = vpop.f32.mrf.mxu0
        %v2156 = vadd.f32 %v2067, %v2155
        %2157 = vmatmul.bf16.gmra.mxu0 %v1924
        %v2158 = vpop.f32.mrf.mxu0
        %v2159 = vadd.f32 %v2070, %v2158
        %v2160 = vpop.f32.mrf.mxu0
        %v2161 = vadd.f32 %v2072, %v2160
        %2162 = vmatmul.bf16.gmra.mxu0 %v1926
        %v2163 = vpop.f32.mrf.mxu0
        %v2164 = vadd.f32 %v2075, %v2163
        %v2165 = vpop.f32.mrf.mxu0
        %v2166 = vadd.f32 %v2077, %v2165
        %2167 = vmatmul.bf16.gmra.mxu0 %v1928
        %v2168 = vpop.f32.mrf.mxu0
        %v2169 = vadd.f32 %v2080, %v2168
        %v2170 = vpop.f32.mrf.mxu0
        %v2171 = vadd.f32 %v2082, %v2170
        %2172 = vmatmul.bf16.gmra.mxu0 %v1930
        %v2173 = vpop.f32.mrf.mxu0
        %v2174 = vadd.f32 %v2085, %v2173
        %v2175 = vpop.f32.mrf.mxu0
        %v2176 = vadd.f32 %v2087, %v2175
        %2177 = vmatmul.bf16.gmra.mxu0 %v1932
        %v2178 = vpop.f32.mrf.mxu0
        %v2179 = vadd.f32 %v2090, %v2178
        %v2180 = vpop.f32.mrf.mxu0
        %v2181 = vadd.f32 %v2092, %v2180
        %2182 = vmatmul.bf16.gmra.mxu0 %v1934
        %v2183 = vpop.f32.mrf.mxu0
        %v2184 = vadd.f32 %v2095, %v2183
        %v2185 = vpop.f32.mrf.mxu0
        %v2186 = vadd.f32 %v2097, %v2185
        %2187 = vmatmul.bf16.gmra.mxu0 %v1936
        %v2188 = vpop.f32.mrf.mxu0
        %v2189 = vadd.f32 %v2100, %v2188
        %v2190 = vpop.f32.mrf.mxu0
        %v2191 = vadd.f32 %v2102, %v2190
        %2192 = vmatmul.bf16.gmra.mxu0 %v1938
        %v2193 = vpop.f32.mrf.mxu0
        %v2194 = vadd.f32 %v2105, %v2193
        %v2195 = vpop.f32.mrf.mxu0
        %v2196 = vadd.f32 %v2107, %v2195
        %2197 = vmatmul.bf16.gmra.mxu0 %v1940
        %v2198 = vpop.f32.mrf.mxu0
        %v2199 = vadd.f32 %v2110, %v2198
        %v2200 = vpop.f32.mrf.mxu0
        %v2201 = vadd.f32 %v2112, %v2200
        %2202 = vmatmul.bf16.gmra.mxu0 %v1942
        %v2203 = vpop.f32.mrf.mxu0
        %v2204 = vadd.f32 %v2115, %v2203
        %v2205 = vpop.f32.mrf.mxu0
        %v2206 = vadd.f32 %v2117, %v2205
        %2207 = vmatmul.bf16.gmra.mxu0 %v1944
        %v2208 = vpop.f32.mrf.mxu0
        %v2209 = vadd.f32 %v2120, %v2208
        %v2210 = vpop.f32.mrf.mxu0
        %v2211 = vadd.f32 %v2122, %v2210
        %2212 = vmatmul.bf16.gmra.mxu0 %v1946
        %v2213 = vpop.f32.mrf.mxu0
        %v2214 = vadd.f32 %v2125, %v2213
        %v2215 = vpop.f32.mrf.mxu0
        %v2216 = vadd.f32 %v2127, %v2215
        %2217 = vmatmul.bf16.gmra.mxu0 %v1948
        %v2218 = vpop.f32.mrf.mxu0
        %v2219 = vadd.f32 %v2130, %v2218
        %v2220 = vpop.f32.mrf.mxu0
        %v2221 = vadd.f32 %v2132, %v2220
        %2222 = vdwg.mxu0
        %v2223 = vadd.f32 %v1885, %v2144
        %v2224 = vadd.f32 %v1886, %v2146
        %v2225 = vadd.f32 %v1887, %v2149
        %v2226 = vadd.f32 %v1888, %v2151
        %v2227 = vadd.f32 %v1889, %v2154
        %v2228 = vadd.f32 %v1890, %v2156
        %v2229 = vadd.f32 %v1891, %v2159
        %v2230 = vadd.f32 %v1892, %v2161
        %v2231 = vadd.f32 %v1893, %v2164
        %v2232 = vadd.f32 %v1894, %v2166
        %v2233 = vadd.f32 %v1895, %v2169
        %v2234 = vadd.f32 %v1896, %v2171
        %v2235 = vadd.f32 %v1897, %v2174
        %v2236 = vadd.f32 %v1898, %v2176
        %v2237 = vadd.f32 %v1899, %v2179
        %v2238 = vadd.f32 %v1900, %v2181
        %v2239 = vadd.f32 %v1901, %v2184
        %v2240 = vadd.f32 %v1902, %v2186
        %v2241 = vadd.f32 %v1903, %v2189
        %v2242 = vadd.f32 %v1904, %v2191
        %v2243 = vadd.f32 %v1905, %v2194
        %v2244 = vadd.f32 %v1906, %v2196
        %v2245 = vadd.f32 %v1907, %v2199
        %v2246 = vadd.f32 %v1908, %v2201
        %v2247 = vadd.f32 %v1909, %v2204
        %v2248 = vadd.f32 %v1910, %v2206
        %v2249 = vadd.f32 %v1911, %v2209
        %v2250 = vadd.f32 %v1912, %v2211
        %v2251 = vadd.f32 %v1913, %v2214
        %v2252 = vadd.f32 %v1914, %v2216
        %v2253 = vadd.f32 %v1915, %v2219
        %v2254 = vadd.f32 %v1916, %v2221
        %2255 = vst [vmem:[#allocation4] sm:$0xff] %v2223
        %2256 = vst [vmem:[#allocation4 + $0x8] sm:$0xff] %v2224
        %2257 = vst [vmem:[#allocation4 + $0x10] sm:$0xff] %v2225
        %2258 = vst [vmem:[#allocation4 + $0x18] sm:$0xff] %v2226
        %2259 = vst [vmem:[#allocation4 + $0x20] sm:$0xff] %v2227
        %2260 = vst [vmem:[#allocation4 + $0x28] sm:$0xff] %v2228
        %2261 = vst [vmem:[#allocation4 + $0x30] sm:$0xff] %v2229
        %2262 = vst [vmem:[#allocation4 + $0x38] sm:$0xff] %v2230
        %2263 = vst [vmem:[#allocation4 + $0x40] sm:$0xff] %v2231
        %2264 = vst [vmem:[#allocation4 + $0x48] sm:$0xff] %v2232
        %2265 = vst [vmem:[#allocation4 + $0x50] sm:$0xff] %v2233
        %2266 = vst [vmem:[#allocation4 + $0x58] sm:$0xff] %v2234
        %2267 = vst [vmem:[#allocation4 + $0x60] sm:$0xff] %v2235
        %2268 = vst [vmem:[#allocation4 + $0x68] sm:$0xff] %v2236
        %2269 = vst [vmem:[#allocation4 + $0x70] sm:$0xff] %v2237
        %2270 = vst [vmem:[#allocation4 + $0x78] sm:$0xff] %v2238
        %2271 = vst [vmem:[#allocation4 + $0x80] sm:$0xff] %v2239
        %2272 = vst [vmem:[#allocation4 + $0x88] sm:$0xff] %v2240
        %2273 = vst [vmem:[#allocation4 + $0x90] sm:$0xff] %v2241
        %2274 = vst [vmem:[#allocation4 + $0x98] sm:$0xff] %v2242
        %2275 = vst [vmem:[#allocation4 + $0xa0] sm:$0xff] %v2243
        %2276 = vst [vmem:[#allocation4 + $0xa8] sm:$0xff] %v2244
        %2277 = vst [vmem:[#allocation4 + $0xb0] sm:$0xff] %v2245
        %2278 = vst [vmem:[#allocation4 + $0xb8] sm:$0xff] %v2246
        %2279 = vst [vmem:[#allocation4 + $0xc0] sm:$0xff] %v2247
        %2280 = vst [vmem:[#allocation4 + $0xc8] sm:$0xff] %v2248
        %2281 = vst [vmem:[#allocation4 + $0xd0] sm:$0xff] %v2249
        %2282 = vst [vmem:[#allocation4 + $0xd8] sm:$0xff] %v2250
        %2283 = vst [vmem:[#allocation4 + $0xe0] sm:$0xff] %v2251
        %2284 = vst [vmem:[#allocation4 + $0xe8] sm:$0xff] %v2252
        %2285 = vst [vmem:[#allocation4 + $0xf0] sm:$0xff] %v2253
        %2286 = vst [vmem:[#allocation4 + $0xf8] sm:$0xff] %v2254
        %2287 = vst.msk [vmem:[#allocation2] sm:$0xff] %vm1660, %v988
        %2288 = vst.msk [vmem:[#allocation2 + $0x8] sm:$0xff] %vm1660, %v989
        %2289 = vst.msk [vmem:[#allocation2 + $0x10] sm:$0xff] %vm1660, %v990
        %2290 = vst.msk [vmem:[#allocation2 + $0x18] sm:$0xff] %vm1660, %v991
        %2291 = vst.msk [vmem:[#allocation2 + $0x20] sm:$0xff] %vm1660, %v992
        %2292 = vst.msk [vmem:[#allocation2 + $0x28] sm:$0xff] %vm1660, %v993
        %2293 = vst.msk [vmem:[#allocation2 + $0x30] sm:$0xff] %vm1660, %v994
        %2294 = vst.msk [vmem:[#allocation2 + $0x38] sm:$0xff] %vm1660, %v995
        %2295 = vst.msk [vmem:[#allocation2 + $0x40] sm:$0xff] %vm1660, %v996
        %2296 = vst.msk [vmem:[#allocation2 + $0x48] sm:$0xff] %vm1660, %v997
        %2297 = vst.msk [vmem:[#allocation2 + $0x50] sm:$0xff] %vm1660, %v998
        %2298 = vst.msk [vmem:[#allocation2 + $0x58] sm:$0xff] %vm1660, %v999
        %2299 = vst.msk [vmem:[#allocation2 + $0x60] sm:$0xff] %vm1660, %v1000
        %2300 = vst.msk [vmem:[#allocation2 + $0x68] sm:$0xff] %vm1660, %v1001
        %2301 = vst.msk [vmem:[#allocation2 + $0x70] sm:$0xff] %vm1660, %v1002
        %2302 = vst.msk [vmem:[#allocation2 + $0x78] sm:$0xff] %vm1660, %v1003
        %2303 = vst.msk [vmem:[#allocation2 + $0x80] sm:$0xff] %vm1660, %v1004
        %2304 = vst.msk [vmem:[#allocation2 + $0x88] sm:$0xff] %vm1660, %v1005
        %2305 = vst.msk [vmem:[#allocation2 + $0x90] sm:$0xff] %vm1660, %v1006
        %2306 = vst.msk [vmem:[#allocation2 + $0x98] sm:$0xff] %vm1660, %v1007
        %2307 = vst.msk [vmem:[#allocation2 + $0xa0] sm:$0xff] %vm1660, %v1008
        %2308 = vst.msk [vmem:[#allocation2 + $0xa8] sm:$0xff] %vm1660, %v1009
        %2309 = vst.msk [vmem:[#allocation2 + $0xb0] sm:$0xff] %vm1660, %v1010
        %2310 = vst.msk [vmem:[#allocation2 + $0xb8] sm:$0xff] %vm1660, %v1011
        %2311 = vst.msk [vmem:[#allocation2 + $0xc0] sm:$0xff] %vm1660, %v1012
        %2312 = vst.msk [vmem:[#allocation2 + $0xc8] sm:$0xff] %vm1660, %v1013
        %2313 = vst.msk [vmem:[#allocation2 + $0xd0] sm:$0xff] %vm1660, %v1014
        %2314 = vst.msk [vmem:[#allocation2 + $0xd8] sm:$0xff] %vm1660, %v1015
        %2315 = vst.msk [vmem:[#allocation2 + $0xe0] sm:$0xff] %vm1660, %v1016
        %2316 = vst.msk [vmem:[#allocation2 + $0xe8] sm:$0xff] %vm1660, %v1017
        %2317 = vst.msk [vmem:[#allocation2 + $0xf0] sm:$0xff] %vm1660, %v1018
        %2318 = vst.msk [vmem:[#allocation2 + $0xf8] sm:$0xff] %vm1660, %v1019
        %p2319 = scmp.eq.s32.totalorder %s30, 1
        // Predicated region
        $region49: #{tpu_custom_call.1} parent=31 // pred_check
          %p2320 = pneg %p2319
        $region50: #{tpu_custom_call.1} parent=31 // pred_check_branch
          %2322 = sbr.rel (%p2320) target = $region52
        $region51: #{tpu_custom_call.1} parent=31 // pred_region
          %v2323 = vld [vmem:[#allocation3] sm:$0xff]
          %v2324 = vld [vmem:[#allocation3 + $0x8] sm:$0xff]
          %v2325 = vld [vmem:[#allocation3 + $0x10] sm:$0xff]
          %v2326 = vld [vmem:[#allocation3 + $0x18] sm:$0xff]
          %v2327 = vld [vmem:[#allocation3 + $0x20] sm:$0xff]
          %v2328 = vld [vmem:[#allocation3 + $0x28] sm:$0xff]
          %v2329 = vld [vmem:[#allocation3 + $0x30] sm:$0xff]
          %v2330 = vld [vmem:[#allocation3 + $0x38] sm:$0xff]
          %v2331 = vld [vmem:[#allocation3 + $0x40] sm:$0xff]
          %v2332 = vld [vmem:[#allocation3 + $0x48] sm:$0xff]
          %v2333 = vld [vmem:[#allocation3 + $0x50] sm:$0xff]
          %v2334 = vld [vmem:[#allocation3 + $0x58] sm:$0xff]
          %v2335 = vld [vmem:[#allocation3 + $0x60] sm:$0xff]
          %v2336 = vld [vmem:[#allocation3 + $0x68] sm:$0xff]
          %v2337 = vld [vmem:[#allocation3 + $0x70] sm:$0xff]
          %v2338 = vld [vmem:[#allocation3 + $0x78] sm:$0xff]
          %v2339 = vld [vmem:[#allocation3 + $0x80] sm:$0xff]
          %v2340 = vld [vmem:[#allocation3 + $0x88] sm:$0xff]
          %v2341 = vld [vmem:[#allocation3 + $0x90] sm:$0xff]
          %v2342 = vld [vmem:[#allocation3 + $0x98] sm:$0xff]
          %v2343 = vld [vmem:[#allocation3 + $0xa0] sm:$0xff]
          %v2344 = vld [vmem:[#allocation3 + $0xa8] sm:$0xff]
          %v2345 = vld [vmem:[#allocation3 + $0xb0] sm:$0xff]
          %v2346 = vld [vmem:[#allocation3 + $0xb8] sm:$0xff]
          %v2347 = vld [vmem:[#allocation3 + $0xc0] sm:$0xff]
          %v2348 = vld [vmem:[#allocation3 + $0xc8] sm:$0xff]
          %v2349 = vld [vmem:[#allocation3 + $0xd0] sm:$0xff]
          %v2350 = vld [vmem:[#allocation3 + $0xd8] sm:$0xff]
          %v2351 = vld [vmem:[#allocation3 + $0xe0] sm:$0xff]
          %v2352 = vld [vmem:[#allocation3 + $0xe8] sm:$0xff]
          %v2353 = vld [vmem:[#allocation3 + $0xf0] sm:$0xff]
          %v2354 = vld [vmem:[#allocation3 + $0xf8] sm:$0xff]
          %v2355 = vrcp.pop %v2323
          %v2356 = vrcp.pop %v2324
          %v2357 = vrcp.pop %v2325
          %v2358 = vrcp.pop %v2326
          %v2359 = vrcp.pop %v2327
          %v2360 = vrcp.pop %v2328
          %v2361 = vrcp.pop %v2329
          %v2362 = vrcp.pop %v2330
          %v2363 = vrcp.pop %v2331
          %v2364 = vrcp.pop %v2332
          %v2365 = vrcp.pop %v2333
          %v2366 = vrcp.pop %v2334
          %v2367 = vrcp.pop %v2335
          %v2368 = vrcp.pop %v2336
          %v2369 = vrcp.pop %v2337
          %v2370 = vrcp.pop %v2338
          %v2371 = vrcp.pop %v2339
          %v2372 = vrcp.pop %v2340
          %v2373 = vrcp.pop %v2341
          %v2374 = vrcp.pop %v2342
          %v2375 = vrcp.pop %v2343
          %v2376 = vrcp.pop %v2344
          %v2377 = vrcp.pop %v2345
          %v2378 = vrcp.pop %v2346
          %v2379 = vrcp.pop %v2347
          %v2380 = vrcp.pop %v2348
          %v2381 = vrcp.pop %v2349
          %v2382 = vrcp.pop %v2350
          %v2383 = vrcp.pop %v2351
          %v2384 = vrcp.pop %v2352
          %v2385 = vrcp.pop %v2353
          %v2386 = vrcp.pop %v2354
          %v2387 = vld [vmem:[#allocation4] sm:$0xff]
          %v2388 = vld [vmem:[#allocation4 + $0x8] sm:$0xff]
          %v2389 = vld [vmem:[#allocation4 + $0x10] sm:$0xff]
          %v2390 = vld [vmem:[#allocation4 + $0x18] sm:$0xff]
          %v2391 = vld [vmem:[#allocation4 + $0x20] sm:$0xff]
          %v2392 = vld [vmem:[#allocation4 + $0x28] sm:$0xff]
          %v2393 = vld [vmem:[#allocation4 + $0x30] sm:$0xff]
          %v2394 = vld [vmem:[#allocation4 + $0x38] sm:$0xff]
          %v2395 = vld [vmem:[#allocation4 + $0x40] sm:$0xff]
          %v2396 = vld [vmem:[#allocation4 + $0x48] sm:$0xff]
          %v2397 = vld [vmem:[#allocation4 + $0x50] sm:$0xff]
          %v2398 = vld [vmem:[#allocation4 + $0x58] sm:$0xff]
          %v2399 = vld [vmem:[#allocation4 + $0x60] sm:$0xff]
          %v2400 = vld [vmem:[#allocation4 + $0x68] sm:$0xff]
          %v2401 = vld [vmem:[#allocation4 + $0x70] sm:$0xff]
          %v2402 = vld [vmem:[#allocation4 + $0x78] sm:$0xff]
          %v2403 = vld [vmem:[#allocation4 + $0x80] sm:$0xff]
          %v2404 = vld [vmem:[#allocation4 + $0x88] sm:$0xff]
          %v2405 = vld [vmem:[#allocation4 + $0x90] sm:$0xff]
          %v2406 = vld [vmem:[#allocation4 + $0x98] sm:$0xff]
          %v2407 = vld [vmem:[#allocation4 + $0xa0] sm:$0xff]
          %v2408 = vld [vmem:[#allocation4 + $0xa8] sm:$0xff]
          %v2409 = vld [vmem:[#allocation4 + $0xb0] sm:$0xff]
          %v2410 = vld [vmem:[#allocation4 + $0xb8] sm:$0xff]
          %v2411 = vld [vmem:[#allocation4 + $0xc0] sm:$0xff]
          %v2412 = vld [vmem:[#allocation4 + $0xc8] sm:$0xff]
          %v2413 = vld [vmem:[#allocation4 + $0xd0] sm:$0xff]
          %v2414 = vld [vmem:[#allocation4 + $0xd8] sm:$0xff]
          %v2415 = vld [vmem:[#allocation4 + $0xe0] sm:$0xff]
          %v2416 = vld [vmem:[#allocation4 + $0xe8] sm:$0xff]
          %v2417 = vld [vmem:[#allocation4 + $0xf0] sm:$0xff]
          %v2418 = vld [vmem:[#allocation4 + $0xf8] sm:$0xff]
          %2420 = vset.pattern.permute.xlu0 0
          %2421 = vperm.xlu0 %2420, %v2355
          %v2422 = vpop.permute.xlu0 %2421
          %2425 = vset.pattern.permute.xlu0 0
          %2426 = vperm.xlu0 %2425, %v2356
          %v2427 = vpop.permute.xlu0 %2426
          %2430 = vset.pattern.permute.xlu0 0
          %2431 = vperm.xlu0 %2430, %v2357
          %v2432 = vpop.permute.xlu0 %2431
          %2435 = vset.pattern.permute.xlu0 0
          %2436 = vperm.xlu0 %2435, %v2358
          %v2437 = vpop.permute.xlu0 %2436
          %2440 = vset.pattern.permute.xlu0 0
          %2441 = vperm.xlu0 %2440, %v2359
          %v2442 = vpop.permute.xlu0 %2441
          %2445 = vset.pattern.permute.xlu0 0
          %2446 = vperm.xlu0 %2445, %v2360
          %v2447 = vpop.permute.xlu0 %2446
          %2450 = vset.pattern.permute.xlu0 0
          %2451 = vperm.xlu0 %2450, %v2361
          %v2452 = vpop.permute.xlu0 %2451
          %2455 = vset.pattern.permute.xlu0 0
          %2456 = vperm.xlu0 %2455, %v2362
          %v2457 = vpop.permute.xlu0 %2456
          %2460 = vset.pattern.permute.xlu0 0
          %2461 = vperm.xlu0 %2460, %v2363
          %v2462 = vpop.permute.xlu0 %2461
          %2465 = vset.pattern.permute.xlu0 0
          %2466 = vperm.xlu0 %2465, %v2364
          %v2467 = vpop.permute.xlu0 %2466
          %2470 = vset.pattern.permute.xlu0 0
          %2471 = vperm.xlu0 %2470, %v2365
          %v2472 = vpop.permute.xlu0 %2471
          %2475 = vset.pattern.permute.xlu0 0
          %2476 = vperm.xlu0 %2475, %v2366
          %v2477 = vpop.permute.xlu0 %2476
          %2480 = vset.pattern.permute.xlu0 0
          %2481 = vperm.xlu0 %2480, %v2367
          %v2482 = vpop.permute.xlu0 %2481
          %2485 = vset.pattern.permute.xlu0 0
          %2486 = vperm.xlu0 %2485, %v2368
          %v2487 = vpop.permute.xlu0 %2486
          %2490 = vset.pattern.permute.xlu0 0
          %2491 = vperm.xlu0 %2490, %v2369
          %v2492 = vpop.permute.xlu0 %2491
          %2495 = vset.pattern.permute.xlu0 0
          %2496 = vperm.xlu0 %2495, %v2370
          %v2497 = vpop.permute.xlu0 %2496
          %2500 = vset.pattern.permute.xlu0 0
          %2501 = vperm.xlu0 %2500, %v2371
          %v2502 = vpop.permute.xlu0 %2501
          %2505 = vset.pattern.permute.xlu0 0
          %2506 = vperm.xlu0 %2505, %v2372
          %v2507 = vpop.permute.xlu0 %2506
          %2510 = vset.pattern.permute.xlu0 0
          %2511 = vperm.xlu0 %2510, %v2373
          %v2512 = vpop.permute.xlu0 %2511
          %2515 = vset.pattern.permute.xlu0 0
          %2516 = vperm.xlu0 %2515, %v2374
          %v2517 = vpop.permute.xlu0 %2516
          %2520 = vset.pattern.permute.xlu0 0
          %2521 = vperm.xlu0 %2520, %v2375
          %v2522 = vpop.permute.xlu0 %2521
          %2525 = vset.pattern.permute.xlu0 0
          %2526 = vperm.xlu0 %2525, %v2376
          %v2527 = vpop.permute.xlu0 %2526
          %2530 = vset.pattern.permute.xlu0 0
          %2531 = vperm.xlu0 %2530, %v2377
          %v2532 = vpop.permute.xlu0 %2531
          %2535 = vset.pattern.permute.xlu0 0
          %2536 = vperm.xlu0 %2535, %v2378
          %v2537 = vpop.permute.xlu0 %2536
          %2540 = vset.pattern.permute.xlu0 0
          %2541 = vperm.xlu0 %2540, %v2379
          %v2542 = vpop.permute.xlu0 %2541
          %2545 = vset.pattern.permute.xlu0 0
          %2546 = vperm.xlu0 %2545, %v2380
          %v2547 = vpop.permute.xlu0 %2546
          %2550 = vset.pattern.permute.xlu0 0
          %2551 = vperm.xlu0 %2550, %v2381
          %v2552 = vpop.permute.xlu0 %2551
          %2555 = vset.pattern.permute.xlu0 0
          %2556 = vperm.xlu0 %2555, %v2382
          %v2557 = vpop.permute.xlu0 %2556
          %2560 = vset.pattern.permute.xlu0 0
          %2561 = vperm.xlu0 %2560, %v2383
          %v2562 = vpop.permute.xlu0 %2561
          %2565 = vset.pattern.permute.xlu0 0
          %2566 = vperm.xlu0 %2565, %v2384
          %v2567 = vpop.permute.xlu0 %2566
          %2570 = vset.pattern.permute.xlu0 0
          %2571 = vperm.xlu0 %2570, %v2385
          %v2572 = vpop.permute.xlu0 %2571
          %2575 = vset.pattern.permute.xlu0 0
          %2576 = vperm.xlu0 %2575, %v2386
          %v2577 = vpop.permute.xlu0 %2576
          %v2579 = vmul.f32 %v2387, %v2422
          %v2580 = vmul.f32 %v2388, %v2427
          %v2581 = vmul.f32 %v2389, %v2432
          %v2582 = vmul.f32 %v2390, %v2437
          %v2583 = vmul.f32 %v2391, %v2442
          %v2584 = vmul.f32 %v2392, %v2447
          %v2585 = vmul.f32 %v2393, %v2452
          %v2586 = vmul.f32 %v2394, %v2457
          %v2587 = vmul.f32 %v2395, %v2462
          %v2588 = vmul.f32 %v2396, %v2467
          %v2589 = vmul.f32 %v2397, %v2472
          %v2590 = vmul.f32 %v2398, %v2477
          %v2591 = vmul.f32 %v2399, %v2482
          %v2592 = vmul.f32 %v2400, %v2487
          %v2593 = vmul.f32 %v2401, %v2492
          %v2594 = vmul.f32 %v2402, %v2497
          %v2595 = vmul.f32 %v2403, %v2502
          %v2596 = vmul.f32 %v2404, %v2507
          %v2597 = vmul.f32 %v2405, %v2512
          %v2598 = vmul.f32 %v2406, %v2517
          %v2599 = vmul.f32 %v2407, %v2522
          %v2600 = vmul.f32 %v2408, %v2527
          %v2601 = vmul.f32 %v2409, %v2532
          %v2602 = vmul.f32 %v2410, %v2537
          %v2603 = vmul.f32 %v2411, %v2542
          %v2604 = vmul.f32 %v2412, %v2547
          %v2605 = vmul.f32 %v2413, %v2552
          %v2606 = vmul.f32 %v2414, %v2557
          %v2607 = vmul.f32 %v2415, %v2562
          %v2608 = vmul.f32 %v2416, %v2567
          %v2609 = vmul.f32 %v2417, %v2572
          %v2610 = vmul.f32 %v2418, %v2577
          %v2611 = vpack.c.bf16 %v2579, %v2579
          %v2612 = vpack.c.bf16 %v2580, %v2580
          %v2613 = vpack.c.bf16 %v2581, %v2581
          %v2614 = vpack.c.bf16 %v2582, %v2582
          %v2615 = vpack.c.bf16 %v2583, %v2583
          %v2616 = vpack.c.bf16 %v2584, %v2584
          %v2617 = vpack.c.bf16 %v2585, %v2585
          %v2618 = vpack.c.bf16 %v2586, %v2586
          %v2619 = vpack.c.bf16 %v2587, %v2587
          %v2620 = vpack.c.bf16 %v2588, %v2588
          %v2621 = vpack.c.bf16 %v2589, %v2589
          %v2622 = vpack.c.bf16 %v2590, %v2590
          %v2623 = vpack.c.bf16 %v2591, %v2591
          %v2624 = vpack.c.bf16 %v2592, %v2592
          %v2625 = vpack.c.bf16 %v2593, %v2593
          %v2626 = vpack.c.bf16 %v2594, %v2594
          %v2627 = vpack.c.bf16 %v2595, %v2595
          %v2628 = vpack.c.bf16 %v2596, %v2596
          %v2629 = vpack.c.bf16 %v2597, %v2597
          %v2630 = vpack.c.bf16 %v2598, %v2598
          %v2631 = vpack.c.bf16 %v2599, %v2599
          %v2632 = vpack.c.bf16 %v2600, %v2600
          %v2633 = vpack.c.bf16 %v2601, %v2601
          %v2634 = vpack.c.bf16 %v2602, %v2602
          %v2635 = vpack.c.bf16 %v2603, %v2603
          %v2636 = vpack.c.bf16 %v2604, %v2604
          %v2637 = vpack.c.bf16 %v2605, %v2605
          %v2638 = vpack.c.bf16 %v2606, %v2606
          %v2639 = vpack.c.bf16 %v2607, %v2607
          %v2640 = vpack.c.bf16 %v2608, %v2608
          %v2641 = vpack.c.bf16 %v2609, %v2609
          %v2642 = vpack.c.bf16 %v2610, %v2610
          %2643 = vst [vmem:[%s304] sm:$0xf] %v2611
          %2644 = vst [vmem:[%s304 + $0x4] sm:$0xf] %v2612
          %2645 = vst [vmem:[%s304 + $0x8] sm:$0xf] %v2613
          %2646 = vst [vmem:[%s304 + $0xc] sm:$0xf] %v2614
          %2647 = vst [vmem:[%s304 + $0x10] sm:$0xf] %v2615
          %2648 = vst [vmem:[%s304 + $0x14] sm:$0xf] %v2616
          %2649 = vst [vmem:[%s304 + $0x18] sm:$0xf] %v2617
          %2650 = vst [vmem:[%s304 + $0x1c] sm:$0xf] %v2618
          %2651 = vst [vmem:[%s304 + $0x20] sm:$0xf] %v2619
          %2652 = vst [vmem:[%s304 + $0x24] sm:$0xf] %v2620
          %2653 = vst [vmem:[%s304 + $0x28] sm:$0xf] %v2621
          %2654 = vst [vmem:[%s304 + $0x2c] sm:$0xf] %v2622
          %2655 = vst [vmem:[%s304 + $0x30] sm:$0xf] %v2623
          %2656 = vst [vmem:[%s304 + $0x34] sm:$0xf] %v2624
          %2657 = vst [vmem:[%s304 + $0x38] sm:$0xf] %v2625
          %2658 = vst [vmem:[%s304 + $0x3c] sm:$0xf] %v2626
          %2659 = vst [vmem:[%s304 + $0x40] sm:$0xf] %v2627
          %2660 = vst [vmem:[%s304 + $0x44] sm:$0xf] %v2628
          %2661 = vst [vmem:[%s304 + $0x48] sm:$0xf] %v2629
          %2662 = vst [vmem:[%s304 + $0x4c] sm:$0xf] %v2630
          %2663 = vst [vmem:[%s304 + $0x50] sm:$0xf] %v2631
          %2664 = vst [vmem:[%s304 + $0x54] sm:$0xf] %v2632
          %2665 = vst [vmem:[%s304 + $0x58] sm:$0xf] %v2633
          %2666 = vst [vmem:[%s304 + $0x5c] sm:$0xf] %v2634
          %2667 = vst [vmem:[%s304 + $0x60] sm:$0xf] %v2635
          %2668 = vst [vmem:[%s304 + $0x64] sm:$0xf] %v2636
          %2669 = vst [vmem:[%s304 + $0x68] sm:$0xf] %v2637
          %2670 = vst [vmem:[%s304 + $0x6c] sm:$0xf] %v2638
          %2671 = vst [vmem:[%s304 + $0x70] sm:$0xf] %v2639
          %2672 = vst [vmem:[%s304 + $0x74] sm:$0xf] %v2640
          %2673 = vst [vmem:[%s304 + $0x78] sm:$0xf] %v2641
          %2674 = vst [vmem:[%s304 + $0x7c] sm:$0xf] %v2642
        $region52: #{tpu_custom_call.1} parent=31 // pred_fallthru
          _
        %s2675 = sand.u32 %s136, 1
        %s2676 = scalar_lea.sflag [#allocation7], %s2675
        %s2677 = sand.u32 %s136, 1
        %s2678 = smul.addr %s2677, 128
        %s2679 = scalar_lea.vmem [#allocation11], %s2678
        // Predicated region
        $region53: #{tpu_custom_call.1} parent=31 // pred_check
          %p2680 = pneg %p146
        $region54: #{tpu_custom_call.1} parent=31 // pred_check_branch
          %2682 = sbr.rel (%p2680) target = $region56
        $region55: #{tpu_custom_call.1} parent=31 // pred_region
          %s2683 = smul.u32 32, %s29
          %2685 = vsyncadd %s2676, 0
          %s2686 = smul.addr %s28, 32
          %s2687 = sadd.s32 %s2683, %s2686
          %s2688 = smul.addr %s2687, 4
          %s2689 = scalar_lea.hbm %s3, %s2688
          %s2690 = sshll.u32 %s2679, 4
          %s2691 = int_to_ptr.vmem [resolvable:$true] %s2690
          %s2692 = sshll.u32 %s2689, 4
          %s2693 = int_to_ptr.hbm [resolvable:$true] %s2692
          %2698 = dma.vmem_to_hbm [thread:$0]  %s2691, 2048, %s2693, %s2676, 64, 64, 4
        $region56: #{tpu_custom_call.1} parent=31 // pred_fallthru
          _
      $region32: #{tpu_custom_call.1} parent=5 // pred_fallthru
        _
      %p2699 = scmp.le.s32.totalorder 2, %s18
      // Predicated region
      $region57: #{tpu_custom_call.1} parent=5 // pred_check
        %p2700 = pneg %p2699
      $region58: #{tpu_custom_call.1} parent=5 // pred_check_branch
        %2702 = sbr.rel (%p2700) target = $region60
      $region59: #{tpu_custom_call.1} parent=5 // pred_region
        %s2703 = ssub.s32 %s18, 2
        // Predicated region
        $region61: #{tpu_custom_call.1} parent=59 // pred_check
          %p2704 = pneg %p152
        $region62: #{tpu_custom_call.1} parent=59 // pred_check_branch
          %2706 = sbr.rel (%p2704) target = $region64
        $region63: #{tpu_custom_call.1} parent=59 // pred_region
          %s2707 = sand.u32 %s137, 1
          %s2708 = scalar_lea.sflag [#allocation7], %s2707
          %s2709 = sand.u32 %s137, 1
          %s2710 = smul.addr %s2709, 128
          %s2711 = scalar_lea.vmem [#allocation11], %s2710
          %2713 = dma.done %s2708, 2048
        $region64: #{tpu_custom_call.1} parent=59 // pred_fallthru
          _
      $region60: #{tpu_custom_call.1} parent=5 // pred_fallthru
        _
    $region6: #{tpu_custom_call.1} parent=1 // loop_footer
      %s22 = sadd.s32 1, %s18
    $region7: #{tpu_custom_call.1} parent=1 // loop_footer_branch
      %17 = sbr.rel target = $region3
    $region8: #{tpu_custom_call.1} parent=1 // loop_exit
      _
    %2714 = vsyncpa [#allocation6], 1
    %s2715 = scalar_lea.sflag [#allocation6], 1
    %2716 = vsyncpa %s2715, 1
    %2717 = vsyncpa [#allocation9], 1
    %s2718 = scalar_lea.sflag [#allocation9], 1
    %2719 = vsyncpa %s2718, 1
    %2720 = vsyncpa [#allocation7], 1
    %s2721 = scalar_lea.sflag [#allocation7], 1
    %2722 = vsyncpa %s2721, 1

</llo_original>
